<compile_context>
chip_gen: v7x
topology: tpu7x:2x2x1
jax: 0.10.0
libtpu: 0.0.40
codegen_flags: <defaults>
</compile_context>

<pallas_src>
import jax
import jax.numpy as jnp
from jax.experimental import pallas as pl
from jax.experimental.pallas import tpu as pltpu

LINEAR_SIZE = 96 * 4 * 4   # 1536
INNER_DIM = 50
HID_PAD = 128              # hidden width padded to a full lane tile
OUT_DIM = 800
MAX_BATCH_TILE = 1024
VMEM_LIMIT_BYTES = 48 * 1024 * 1024


def _round_up(x, m):
    return (x + m - 1) // m * m


def _classifier_kernel(x_ref,
                       w1_ref, b1_ref,
                       w2_ref, b2_ref,
                       w3_ref, b3_ref,
                       w4_ref, b4_ref,
                       w5_ref, b5_ref,
                       o_ref):
    # x arrives as f32 straight from HBM; cast to bf16 in-kernel (free under
    # DMA slack) so the wrapper never writes a bf16 copy back to HBM.
    x = x_ref[...].astype(jnp.bfloat16)
    # Layer 1: (TB, 1536) bf16 @ (1536, 128) bf16 -> f32, bias+ReLU in f32.
    h = jnp.dot(x, w1_ref[...], preferred_element_type=jnp.float32)
    h = jnp.maximum(h + b1_ref[...], 0.0)
    # Layers 2-4: (TB, 128) @ (128, 128), bf16 operands, f32 accumulate.
    h = jnp.dot(h.astype(jnp.bfloat16), w2_ref[...],
                preferred_element_type=jnp.float32)
    h = jnp.maximum(h + b2_ref[...], 0.0)
    h = jnp.dot(h.astype(jnp.bfloat16), w3_ref[...],
                preferred_element_type=jnp.float32)
    h = jnp.maximum(h + b3_ref[...], 0.0)
    h = jnp.dot(h.astype(jnp.bfloat16), w4_ref[...],
                preferred_element_type=jnp.float32)
    h = jnp.maximum(h + b4_ref[...], 0.0)
    # Layer 5 (no activation): (TB, 128) @ (128, 800) -> (TB, 800) f32.
    out = jnp.dot(h.astype(jnp.bfloat16), w5_ref[...],
                  preferred_element_type=jnp.float32)
    o_ref[...] = (out + b5_ref[...]).astype(o_ref.dtype)


def _pad_to(a, shape):
    pads = [(0, t - s) for s, t in zip(a.shape, shape)]
    return jnp.pad(a, pads)


def prepare_params(params):
    """One-time weight prep: zero-pad the 50-wide hidden layers to 128 and
    cast matmul operands to bf16 (biases stay f32, shaped (1, N)).

    Call once at init / weight-load time and reuse the result; doing this per
    forward call would add ~10 small XLA ops around a microsecond kernel."""
    (w1, b1), (w2, b2), (w3, b3), (w4, b4), (w5, b5) = params

    w1p = _pad_to(w1, (LINEAR_SIZE, HID_PAD)).astype(jnp.bfloat16)
    w2p = _pad_to(w2, (HID_PAD, HID_PAD)).astype(jnp.bfloat16)
    w3p = _pad_to(w3, (HID_PAD, HID_PAD)).astype(jnp.bfloat16)
    w4p = _pad_to(w4, (HID_PAD, HID_PAD)).astype(jnp.bfloat16)
    w5p = _pad_to(w5, (HID_PAD, OUT_DIM)).astype(jnp.bfloat16)

    b1p = _pad_to(b1, (HID_PAD,)).reshape(1, HID_PAD).astype(jnp.float32)
    b2p = _pad_to(b2, (HID_PAD,)).reshape(1, HID_PAD).astype(jnp.float32)
    b3p = _pad_to(b3, (HID_PAD,)).reshape(1, HID_PAD).astype(jnp.float32)
    b4p = _pad_to(b4, (HID_PAD,)).reshape(1, HID_PAD).astype(jnp.float32)
    b5p = b5.reshape(1, OUT_DIM).astype(jnp.float32)

    return (w1p, b1p, w2p, b2p, w3p, b3p, w4p, b4p, w5p, b5p)


def small_linear_classifier(x, prepared, *, batch_tile=MAX_BATCH_TILE):
    """x: (B, 96, 4, 4) float32 (NCHW). prepared: output of prepare_params.
    Returns (B, 800) float32 logits."""
    B = x.shape[0]
    x_flat = x.reshape(B, -1)          # stays f32; bf16 cast happens in-kernel
    assert x_flat.shape[1] == LINEAR_SIZE

    # Batch tile: multiple of 8 (f32 sublane tile), capped at MAX_BATCH_TILE,
    # and capped at ~B/2 so the grid has >=2 steps whenever possible (lets
    # dimension_semantics=("parallel",) feed both v7x TensorCores).
    tb = min(batch_tile, _round_up(pl.cdiv(max(B, 1), 2), 8))
    grid = (pl.cdiv(B, tb),)

    def _resident(shape):
        # Constant index_map => fetched once, stays resident in VMEM across
        # all grid steps; Buffered(1) skips the pointless second buffer.
        return pl.BlockSpec(shape, lambda i: (0, 0),
                            pipeline_mode=pl.Buffered(1))

    in_specs = [
        pl.BlockSpec((tb, LINEAR_SIZE), lambda i: (i, 0)),      # x: batch-tiled
        _resident((LINEAR_SIZE, HID_PAD)), _resident((1, HID_PAD)),   # w1, b1
        _resident((HID_PAD, HID_PAD)),     _resident((1, HID_PAD)),   # w2, b2
        _resident((HID_PAD, HID_PAD)),     _resident((1, HID_PAD)),   # w3, b3
        _resident((HID_PAD, HID_PAD)),     _resident((1, HID_PAD)),   # w4, b4
        _resident((HID_PAD, OUT_DIM)),     _resident((1, OUT_DIM)),   # w5, b5
    ]
    out_specs = pl.BlockSpec((tb, OUT_DIM), lambda i: (i, 0))

    return pl.pallas_call(
        _classifier_kernel,
        out_shape=jax.ShapeDtypeStruct((B, OUT_DIM), jnp.float32),
        grid=grid,
        in_specs=in_specs,
        out_specs=out_specs,
        compiler_params=pltpu.CompilerParams(
            dimension_semantics=("parallel",),
            vmem_limit_bytes=VMEM_LIMIT_BYTES),
    )(x_flat, *prepared)


def init_params(key):
    """Deterministic init mimicking nn.Linear default (uniform +/- 1/sqrt(fan_in)).

    Weights are stored already transposed to (in_features, out_features)."""
    dims = [(LINEAR_SIZE, INNER_DIM),
            (INNER_DIM, INNER_DIM),
            (INNER_DIM, INNER_DIM),
            (INNER_DIM, INNER_DIM),
            (INNER_DIM, OUT_DIM)]
    params = []
    for (fan_in, fan_out) in dims:
        key, kw, kb = jax.random.split(key, 3)
        bound = 1.0 / (fan_in ** 0.5)
        w = jax.random.uniform(kw, (fan_in, fan_out), jnp.float32, -bound, bound)
        b = jax.random.uniform(kb, (fan_out,), jnp.float32, -bound, bound)
        params.append((w, b))
    return params


def _reference(x, params):
    """Same math as the kernel (bf16 matmul operands, f32 accumulation)."""
    h = x.reshape(x.shape[0], -1)
    for i, (w, b) in enumerate(params):
        h = jnp.dot(h.astype(jnp.bfloat16), w.astype(jnp.bfloat16),
                    preferred_element_type=jnp.float32) + b
        if i < len(params) - 1:
            h = jnp.maximum(h, 0.0)
    return h


def _reference_f32(x, params):
    """Pure f32 reference matching the torch module exactly."""
    h = x.reshape(x.shape[0], -1)
    for i, (w, b) in enumerate(params):
        h = h @ w + b
        if i < len(params) - 1:
            h = jnp.maximum(h, 0.0)
    return h


if __name__ == "__main__":
    key = jax.random.PRNGKey(0)
    kx, kx2, kp = jax.random.split(key, 3)
    params = init_params(kp)
    prepared = prepare_params(params)          # one-time weight prep

    # Small primary case: batch=2.
    x = jax.random.normal(kx, (2, 96, 4, 4), jnp.float32)  # NCHW input
    out = small_linear_classifier(x, prepared)
    out = jax.block_until_ready(out)
    assert out.shape == (2, OUT_DIM)

    ref = _reference(x, params)                 # identical bf16/f32 mixed math
    assert jnp.allclose(out, ref, atol=1e-2, rtol=1e-2)
    ref32 = _reference_f32(x, params)           # pure-f32 torch-equivalent
    assert jnp.allclose(out, ref32, atol=5e-2, rtol=5e-2)

    # Secondary case exercising a multi-step grid (2 tiles, ragged last tile).
    x2 = jax.random.normal(kx2, (270, 96, 4, 4), jnp.float32)
    out2 = jax.block_until_ready(small_linear_classifier(x2, prepared))
    assert out2.shape == (270, OUT_DIM)
    assert jnp.allclose(out2, _reference(x2, params), atol=1e-2, rtol=1e-2)

    print("KERNEL_OK")
</pallas_src>

<mosaic_0001>
module attributes {stable_mosaic.version = 11 : i64} {
  func.func @_classifier_kernel(%arg0: i32, %arg1: memref<8x1536xf32, #tpu.memory_space<vmem>>, %arg2: memref<1536x128xbf16, #tpu.memory_space<vmem>>, %arg3: memref<1x128xf32, #tpu.memory_space<vmem>>, %arg4: memref<128x128xbf16, #tpu.memory_space<vmem>>, %arg5: memref<1x128xf32, #tpu.memory_space<vmem>>, %arg6: memref<128x128xbf16, #tpu.memory_space<vmem>>, %arg7: memref<1x128xf32, #tpu.memory_space<vmem>>, %arg8: memref<128x128xbf16, #tpu.memory_space<vmem>>, %arg9: memref<1x128xf32, #tpu.memory_space<vmem>>, %arg10: memref<128x800xbf16, #tpu.memory_space<vmem>>, %arg11: memref<1x800xf32, #tpu.memory_space<vmem>>, %arg12: memref<8x800xf32, #tpu.memory_space<vmem>>) attributes {dimension_semantics = [#tpu.dimension_semantics<parallel>], iteration_bounds = array<i64: 1>, scalar_prefetch = 0 : i64, scratch_operands = 0 : i64, tpu.core_type = #tpu.core_type<tc>, window_params = [{transform_indices = @transform_0, window_bounds = array<i64: 8, 1536>}, {pipeline_mode = #tpu.pipeline_mode<synchronous>, transform_indices = @transform_1, window_bounds = array<i64: 1536, 128>}, {pipeline_mode = #tpu.pipeline_mode<synchronous>, transform_indices = @transform_2, window_bounds = array<i64: 1, 128>}, {pipeline_mode = #tpu.pipeline_mode<synchronous>, transform_indices = @transform_3, window_bounds = array<i64: 128, 128>}, {pipeline_mode = #tpu.pipeline_mode<synchronous>, transform_indices = @transform_4, window_bounds = array<i64: 1, 128>}, {pipeline_mode = #tpu.pipeline_mode<synchronous>, transform_indices = @transform_5, window_bounds = array<i64: 128, 128>}, {pipeline_mode = #tpu.pipeline_mode<synchronous>, transform_indices = @transform_6, window_bounds = array<i64: 1, 128>}, {pipeline_mode = #tpu.pipeline_mode<synchronous>, transform_indices = @transform_7, window_bounds = array<i64: 128, 128>}, {pipeline_mode = #tpu.pipeline_mode<synchronous>, transform_indices = @transform_8, window_bounds = array<i64: 1, 128>}, {pipeline_mode = #tpu.pipeline_mode<synchronous>, transform_indices = @transform_9, window_bounds = array<i64: 128, 800>}, {pipeline_mode = #tpu.pipeline_mode<synchronous>, transform_indices = @transform_10, window_bounds = array<i64: 1, 800>}, {transform_indices = @transform_11, window_bounds = array<i64: 8, 800>}]} {
    %c0 = arith.constant 0 : index
    %c0_0 = arith.constant 0 : index
    %0 = vector.load %arg1[%c0, %c0_0] : memref<8x1536xf32, #tpu.memory_space<vmem>>, vector<8x1536xf32>
    %1 = arith.truncf %0 : vector<8x1536xf32> to vector<8x1536xbf16>
    %c0_1 = arith.constant 0 : index
    %c0_2 = arith.constant 0 : index
    %2 = vector.load %arg2[%c0_1, %c0_2] : memref<1536x128xbf16, #tpu.memory_space<vmem>>, vector<1536x128xbf16>
    %cst = arith.constant dense<0.000000e+00> : vector<8x128xf32>
    %3 = tpu.matmul %1, %2, %cst {dimension_numbers = #tpu.dot_dimension_numbers<[1], [0], [0], [1], [0, 0, 1, 1], [], []>} : vector<8x1536xbf16>, vector<1536x128xbf16>, vector<8x128xf32> -> vector<8x128xf32>
    %c0_3 = arith.constant 0 : index
    %c0_4 = arith.constant 0 : index
    %4 = vector.load %arg3[%c0_3, %c0_4] : memref<1x128xf32, #tpu.memory_space<vmem>>, vector<1x128xf32>
    %5 = vector.broadcast %4 : vector<1x128xf32> to vector<8x128xf32>
    %6 = arith.addf %3, %5 : vector<8x128xf32>
    %cst_5 = arith.constant 0.000000e+00 : f32
    %7 = vector.broadcast %cst_5 : f32 to vector<8x128xf32>
    %8 = arith.maximumf %6, %7 : vector<8x128xf32>
    %9 = arith.truncf %8 : vector<8x128xf32> to vector<8x128xbf16>
    %c0_6 = arith.constant 0 : index
    %c0_7 = arith.constant 0 : index
    %10 = vector.load %arg4[%c0_6, %c0_7] : memref<128x128xbf16, #tpu.memory_space<vmem>>, vector<128x128xbf16>
    %cst_8 = arith.constant dense<0.000000e+00> : vector<8x128xf32>
    %11 = tpu.matmul %9, %10, %cst_8 {dimension_numbers = #tpu.dot_dimension_numbers<[1], [0], [0], [1], [0, 0, 1, 1], [], []>} : vector<8x128xbf16>, vector<128x128xbf16>, vector<8x128xf32> -> vector<8x128xf32>
    %c0_9 = arith.constant 0 : index
    %c0_10 = arith.constant 0 : index
    %12 = vector.load %arg5[%c0_9, %c0_10] : memref<1x128xf32, #tpu.memory_space<vmem>>, vector<1x128xf32>
    %13 = vector.broadcast %12 : vector<1x128xf32> to vector<8x128xf32>
    %14 = arith.addf %11, %13 : vector<8x128xf32>
    %cst_11 = arith.constant 0.000000e+00 : f32
    %15 = vector.broadcast %cst_11 : f32 to vector<8x128xf32>
    %16 = arith.maximumf %14, %15 : vector<8x128xf32>
    %17 = arith.truncf %16 : vector<8x128xf32> to vector<8x128xbf16>
    %c0_12 = arith.constant 0 : index
    %c0_13 = arith.constant 0 : index
    %18 = vector.load %arg6[%c0_12, %c0_13] : memref<128x128xbf16, #tpu.memory_space<vmem>>, vector<128x128xbf16>
    %cst_14 = arith.constant dense<0.000000e+00> : vector<8x128xf32>
    %19 = tpu.matmul %17, %18, %cst_14 {dimension_numbers = #tpu.dot_dimension_numbers<[1], [0], [0], [1], [0, 0, 1, 1], [], []>} : vector<8x128xbf16>, vector<128x128xbf16>, vector<8x128xf32> -> vector<8x128xf32>
    %c0_15 = arith.constant 0 : index
    %c0_16 = arith.constant 0 : index
    %20 = vector.load %arg7[%c0_15, %c0_16] : memref<1x128xf32, #tpu.memory_space<vmem>>, vector<1x128xf32>
    %21 = vector.broadcast %20 : vector<1x128xf32> to vector<8x128xf32>
    %22 = arith.addf %19, %21 : vector<8x128xf32>
    %cst_17 = arith.constant 0.000000e+00 : f32
    %23 = vector.broadcast %cst_17 : f32 to vector<8x128xf32>
    %24 = arith.maximumf %22, %23 : vector<8x128xf32>
    %25 = arith.truncf %24 : vector<8x128xf32> to vector<8x128xbf16>
    %c0_18 = arith.constant 0 : index
    %c0_19 = arith.constant 0 : index
    %26 = vector.load %arg8[%c0_18, %c0_19] : memref<128x128xbf16, #tpu.memory_space<vmem>>, vector<128x128xbf16>
    %cst_20 = arith.constant dense<0.000000e+00> : vector<8x128xf32>
    %27 = tpu.matmul %25, %26, %cst_20 {dimension_numbers = #tpu.dot_dimension_numbers<[1], [0], [0], [1], [0, 0, 1, 1], [], []>} : vector<8x128xbf16>, vector<128x128xbf16>, vector<8x128xf32> -> vector<8x128xf32>
    %c0_21 = arith.constant 0 : index
    %c0_22 = arith.constant 0 : index
    %28 = vector.load %arg9[%c0_21, %c0_22] : memref<1x128xf32, #tpu.memory_space<vmem>>, vector<1x128xf32>
    %29 = vector.broadcast %28 : vector<1x128xf32> to vector<8x128xf32>
    %30 = arith.addf %27, %29 : vector<8x128xf32>
    %cst_23 = arith.constant 0.000000e+00 : f32
    %31 = vector.broadcast %cst_23 : f32 to vector<8x128xf32>
    %32 = arith.maximumf %30, %31 : vector<8x128xf32>
    %33 = arith.truncf %32 : vector<8x128xf32> to vector<8x128xbf16>
    %c0_24 = arith.constant 0 : index
    %c0_25 = arith.constant 0 : index
    %34 = vector.load %arg10[%c0_24, %c0_25] : memref<128x800xbf16, #tpu.memory_space<vmem>>, vector<128x800xbf16>
    %cst_26 = arith.constant dense<0.000000e+00> : vector<8x800xf32>
    %35 = tpu.matmul %33, %34, %cst_26 {dimension_numbers = #tpu.dot_dimension_numbers<[1], [0], [0], [1], [0, 0, 1, 1], [], []>} : vector<8x128xbf16>, vector<128x800xbf16>, vector<8x800xf32> -> vector<8x800xf32>
    %c0_27 = arith.constant 0 : index
    %c0_28 = arith.constant 0 : index
    %36 = vector.load %arg11[%c0_27, %c0_28] : memref<1x800xf32, #tpu.memory_space<vmem>>, vector<1x800xf32>
    %37 = vector.broadcast %36 : vector<1x800xf32> to vector<8x800xf32>
    %38 = arith.addf %35, %37 : vector<8x800xf32>
    %c0_29 = arith.constant 0 : index
    %c0_30 = arith.constant 0 : index
    %39 = vector.load %arg12[%c0_29, %c0_30] : memref<8x800xf32, #tpu.memory_space<vmem>>, vector<8x800xf32>
    tpu.vector_store %arg12[%c0_29, %c0_30], %38 {strides = array<i32>} : memref<8x800xf32, #tpu.memory_space<vmem>>, vector<8x800xf32>,
    return
  }
  func.func @transform_0(%arg0: i32) -> (i32, i32) {
    %c0_i32 = arith.constant 0 : i32
    %c0_i32_0 = arith.constant 0 : i32
    return %arg0, %c0_i32 : i32, i32
  }
  func.func @transform_1(%arg0: i32) -> (i32, i32) {
    %c0_i32 = arith.constant 0 : i32
    %c0_i32_0 = arith.constant 0 : i32
    %c0_i32_1 = arith.constant 0 : i32
    return %c0_i32, %c0_i32_0 : i32, i32
  }
  func.func @transform_2(%arg0: i32) -> (i32, i32) {
    %c0_i32 = arith.constant 0 : i32
    %c0_i32_0 = arith.constant 0 : i32
    %c0_i32_1 = arith.constant 0 : i32
    return %c0_i32, %c0_i32_0 : i32, i32
  }
  func.func @transform_3(%arg0: i32) -> (i32, i32) {
    %c0_i32 = arith.constant 0 : i32
    %c0_i32_0 = arith.constant 0 : i32
    %c0_i32_1 = arith.constant 0 : i32
    return %c0_i32, %c0_i32_0 : i32, i32
  }
  func.func @transform_4(%arg0: i32) -> (i32, i32) {
    %c0_i32 = arith.constant 0 : i32
    %c0_i32_0 = arith.constant 0 : i32
    %c0_i32_1 = arith.constant 0 : i32
    return %c0_i32, %c0_i32_0 : i32, i32
  }
  func.func @transform_5(%arg0: i32) -> (i32, i32) {
    %c0_i32 = arith.constant 0 : i32
    %c0_i32_0 = arith.constant 0 : i32
    %c0_i32_1 = arith.constant 0 : i32
    return %c0_i32, %c0_i32_0 : i32, i32
  }
  func.func @transform_6(%arg0: i32) -> (i32, i32) {
    %c0_i32 = arith.constant 0 : i32
    %c0_i32_0 = arith.constant 0 : i32
    %c0_i32_1 = arith.constant 0 : i32
    return %c0_i32, %c0_i32_0 : i32, i32
  }
  func.func @transform_7(%arg0: i32) -> (i32, i32) {
    %c0_i32 = arith.constant 0 : i32
    %c0_i32_0 = arith.constant 0 : i32
    %c0_i32_1 = arith.constant 0 : i32
    return %c0_i32, %c0_i32_0 : i32, i32
  }
  func.func @transform_8(%arg0: i32) -> (i32, i32) {
    %c0_i32 = arith.constant 0 : i32
    %c0_i32_0 = arith.constant 0 : i32
    %c0_i32_1 = arith.constant 0 : i32
    return %c0_i32, %c0_i32_0 : i32, i32
  }
  func.func @transform_9(%arg0: i32) -> (i32, i32) {
    %c0_i32 = arith.constant 0 : i32
    %c0_i32_0 = arith.constant 0 : i32
    %c0_i32_1 = arith.constant 0 : i32
    return %c0_i32, %c0_i32_0 : i32, i32
  }
  func.func @transform_10(%arg0: i32) -> (i32, i32) {
    %c0_i32 = arith.constant 0 : i32
    %c0_i32_0 = arith.constant 0 : i32
    %c0_i32_1 = arith.constant 0 : i32
    return %c0_i32, %c0_i32_0 : i32, i32
  }
  func.func @transform_11(%arg0: i32) -> (i32, i32) {
    %c0_i32 = arith.constant 0 : i32
    %c0_i32_0 = arith.constant 0 : i32
    return %arg0, %c0_i32 : i32, i32
  }
}

</mosaic_0001>

<llo_original>
// kernel: tpu_custom_call.1
$region0: #{tpu_custom_call.1}
  #allocation0 [shape = 'u32[]', space=smem, size = 0x4, offset = 0x4, fixed_abs, tag = 'smem constant byte address 0x4 - core index']
  #allocation1 [shape = 'u32[144,128]{1,0:T(1,128)}', space=vmem, size = 0x12000, scoped, tag = 'internal scratch']
  %s0 = inlined_call_operand.hbm [shape: f32[2,1536], index: 0, kind: input, shape index: {}]
  %s1 = inlined_call_operand.vmem [shape: bf16[1536,128], index: 1, kind: input, shape index: {}]
  %s2 = inlined_call_operand.vmem [shape: f32[1,128], index: 2, kind: input, shape index: {}]
  %s3 = inlined_call_operand.vmem [shape: bf16[128,128], index: 3, kind: input, shape index: {}]
  %s4 = inlined_call_operand.vmem [shape: f32[1,128], index: 4, kind: input, shape index: {}]
  %s5 = inlined_call_operand.hbm [shape: bf16[128,128], index: 5, kind: input, shape index: {}]
  %s6 = inlined_call_operand.vmem [shape: f32[1,128], index: 6, kind: input, shape index: {}]
  %s7 = inlined_call_operand.hbm [shape: bf16[128,128], index: 7, kind: input, shape index: {}]
  %s8 = inlined_call_operand.vmem [shape: f32[1,128], index: 8, kind: input, shape index: {}]
  %s9 = inlined_call_operand.vmem [shape: bf16[128,800], index: 9, kind: input, shape index: {}]
  %s10 = inlined_call_operand.vmem [shape: f32[1,800], index: 10, kind: input, shape index: {}]
  %s11 = inlined_call_operand.hbm [shape: f32[2,800], index: 11, kind: output, shape index: {}]
  %s12 = sld [smem:[#allocation0]]
  $region66: #{tpu_custom_call.1} parent=0
    _
  %s14 = ssub.s32 1, %s12
  %s15 = scalar_select 0, %s14, %s12
  $region1: #{tpu_custom_call.1} parent=0
    #allocation2 [shape = 'u8[49152]{0}', space=vmem, size = 0xc000, scoped, tag = 'input window, operand 0, single buffered']
    #allocation3 [shape = 's32[1]{0}', space=sflag, size = 0x4, scoped, tag = 'scoped memory for tpu_custom_call.1']
    #allocation4 [shape = 's32[1]{0}', space=sflag, size = 0x4, scoped, tag = 'scoped memory for tpu_custom_call.1']
    #allocation5 [shape = 'u8[32768]{0}', space=vmem, size = 0x8000, scoped, tag = 'input window, operand 5, single buffered']
    #allocation6 [shape = 's32[1]{0}', space=sflag, size = 0x4, scoped, tag = 'scoped memory for tpu_custom_call.1']
    #allocation7 [shape = 'u8[32768]{0}', space=vmem, size = 0x8000, scoped, tag = 'input window, operand 7, single buffered']
    #allocation8 [shape = 'u8[28672]{0}', space=vmem, size = 0x7000, scoped, tag = 'output window, operand 0, single buffered']
    %16 = vsyncpa [#allocation3], 0
    %17 = vsyncpa [#allocation6], 0
    %18 = vsyncpa [#allocation4], 0
    // Predicated region
    $region2: #{tpu_custom_call.1} parent=1 // pred_check
      _
    $region3: #{tpu_custom_call.1} parent=1 // pred_check_branch
      %20 = sbr.rel (0) target = $region5
    $region4: #{tpu_custom_call.1} parent=1 // pred_region
      %s22 = ssub.s32 1536, 384
      %23 = vsyncadd [#allocation3], %s22
      %s24 = sshll.u32 [#allocation2], 4
      %s25 = int_to_ptr.vmem [resolvable:$true] %s24
      %30 = dma.hbm_to_vmem [thread:$0]  %s0, 384, %s25, [#allocation3], 384, 384, 24
    $region5: #{tpu_custom_call.1} parent=1 // pred_fallthru
      _
    // Predicated region
    $region6: #{tpu_custom_call.1} parent=1 // pred_check
      _
    $region7: #{tpu_custom_call.1} parent=1 // pred_check_branch
      %32 = sbr.rel (0) target = $region9
    $region8: #{tpu_custom_call.1} parent=1 // pred_region
      _
    $region9: #{tpu_custom_call.1} parent=1 // pred_fallthru
      _
    // Predicated region
    $region10: #{tpu_custom_call.1} parent=1 // pred_check
      _
    $region11: #{tpu_custom_call.1} parent=1 // pred_check_branch
      %34 = sbr.rel (0) target = $region13
    $region12: #{tpu_custom_call.1} parent=1 // pred_region
      _
    $region13: #{tpu_custom_call.1} parent=1 // pred_fallthru
      _
    // Predicated region
    $region14: #{tpu_custom_call.1} parent=1 // pred_check
      _
    $region15: #{tpu_custom_call.1} parent=1 // pred_check_branch
      %36 = sbr.rel (0) target = $region17
    $region16: #{tpu_custom_call.1} parent=1 // pred_region
      _
    $region17: #{tpu_custom_call.1} parent=1 // pred_fallthru
      _
    // Predicated region
    $region18: #{tpu_custom_call.1} parent=1 // pred_check
      _
    $region19: #{tpu_custom_call.1} parent=1 // pred_check_branch
      %38 = sbr.rel (0) target = $region21
    $region20: #{tpu_custom_call.1} parent=1 // pred_region
      _
    $region21: #{tpu_custom_call.1} parent=1 // pred_fallthru
      _
    // Predicated region
    $region22: #{tpu_custom_call.1} parent=1 // pred_check
      _
    $region23: #{tpu_custom_call.1} parent=1 // pred_check_branch
      %40 = sbr.rel (0) target = $region25
    $region24: #{tpu_custom_call.1} parent=1 // pred_region
      %s42 = ssub.s32 1024, 1024
      %43 = vsyncadd [#allocation6], %s42
      %s44 = sshll.u32 [#allocation5], 4
      %s45 = int_to_ptr.vmem [resolvable:$true] %s44
      %50 = dma.hbm_to_vmem [thread:$0]  %s5, 1024, %s45, [#allocation6], 64, 64, 4
    $region25: #{tpu_custom_call.1} parent=1 // pred_fallthru
      _
    // Predicated region
    $region26: #{tpu_custom_call.1} parent=1 // pred_check
      _
    $region27: #{tpu_custom_call.1} parent=1 // pred_check_branch
      %52 = sbr.rel (0) target = $region29
    $region28: #{tpu_custom_call.1} parent=1 // pred_region
      _
    $region29: #{tpu_custom_call.1} parent=1 // pred_fallthru
      _
    // Predicated region
    $region30: #{tpu_custom_call.1} parent=1 // pred_check
      _
    $region31: #{tpu_custom_call.1} parent=1 // pred_check_branch
      %54 = sbr.rel (0) target = $region33
    $region32: #{tpu_custom_call.1} parent=1 // pred_region
      %s56 = ssub.s32 1024, 1024
      %57 = vsyncadd [#allocation6], %s56
      %s58 = sshll.u32 [#allocation7], 4
      %s59 = int_to_ptr.vmem [resolvable:$true] %s58
      %64 = dma.hbm_to_vmem [thread:$0]  %s7, 1024, %s59, [#allocation6], 64, 64, 4
    $region33: #{tpu_custom_call.1} parent=1 // pred_fallthru
      _
    // Predicated region
    $region34: #{tpu_custom_call.1} parent=1 // pred_check
      _
    $region35: #{tpu_custom_call.1} parent=1 // pred_check_branch
      %66 = sbr.rel (0) target = $region37
    $region36: #{tpu_custom_call.1} parent=1 // pred_region
      _
    $region37: #{tpu_custom_call.1} parent=1 // pred_fallthru
      _
    // Predicated region
    $region38: #{tpu_custom_call.1} parent=1 // pred_check
      _
    $region39: #{tpu_custom_call.1} parent=1 // pred_check_branch
      %68 = sbr.rel (0) target = $region41
    $region40: #{tpu_custom_call.1} parent=1 // pred_region
      _
    $region41: #{tpu_custom_call.1} parent=1 // pred_fallthru
      _
    // Predicated region
    $region42: #{tpu_custom_call.1} parent=1 // pred_check
      _
    $region43: #{tpu_custom_call.1} parent=1 // pred_check_branch
      %70 = sbr.rel (0) target = $region45
    $region44: #{tpu_custom_call.1} parent=1 // pred_region
      _
    $region45: #{tpu_custom_call.1} parent=1 // pred_fallthru
      _
    // Predicated region
    $region46: #{tpu_custom_call.1} parent=1 // pred_check
      _
    $region47: #{tpu_custom_call.1} parent=1 // pred_check_branch
      %72 = sbr.rel (0) target = $region49
    $region48: #{tpu_custom_call.1} parent=1 // pred_region
      %73 = dma.done [#allocation3], 1536
    $region49: #{tpu_custom_call.1} parent=1 // pred_fallthru
      _
    // Predicated region
    $region50: #{tpu_custom_call.1} parent=1 // pred_check
      _
    $region51: #{tpu_custom_call.1} parent=1 // pred_check_branch
      %75 = sbr.rel (0) target = $region53
    $region52: #{tpu_custom_call.1} parent=1 // pred_region
      %76 = dma.done [#allocation6], 1024
    $region53: #{tpu_custom_call.1} parent=1 // pred_fallthru
      _
    // Predicated region
    $region54: #{tpu_custom_call.1} parent=1 // pred_check
      _
    $region55: #{tpu_custom_call.1} parent=1 // pred_check_branch
      %78 = sbr.rel (0) target = $region57
    $region56: #{tpu_custom_call.1} parent=1 // pred_region
      %79 = dma.done [#allocation6], 1024
    $region57: #{tpu_custom_call.1} parent=1 // pred_fallthru
      _
    %v81 = vld [vmem:[#allocation2] sm:$0xff]
    %v82 = vld [vmem:[#allocation2 + $0x8] sm:$0xff]
    %v83 = vld [vmem:[#allocation2 + $0x10] sm:$0xff]
    %v84 = vld [vmem:[#allocation2 + $0x18] sm:$0xff]
    %v85 = vld [vmem:[#allocation2 + $0x20] sm:$0xff]
    %v86 = vld [vmem:[#allocation2 + $0x28] sm:$0xff]
    %v87 = vld [vmem:[#allocation2 + $0x30] sm:$0xff]
    %v88 = vld [vmem:[#allocation2 + $0x38] sm:$0xff]
    %v89 = vld [vmem:[#allocation2 + $0x40] sm:$0xff]
    %v90 = vld [vmem:[#allocation2 + $0x48] sm:$0xff]
    %v91 = vld [vmem:[#allocation2 + $0x50] sm:$0xff]
    %v92 = vld [vmem:[#allocation2 + $0x58] sm:$0xff]
    %v105 = vcombine.low %v81, %v84
    %v106 = vcombine.high %v81, %v84
    %v107 = vcombine.low %v87, %v90
    %v108 = vcombine.high %v87, %v90
    %v110 = vunpack.c.l.s4 1983009808
    %v111 = vunpack.c.0.s8 %v110
    %v112 = vlaneseq
    %v113 = vshrl.u32 %v112, 7
    %v114 = vsub.s32 %v111, %v113
    %v115 = vrot.slane %v105, %v114
    %v117 = vunpack.c.l.s4 1983009808
    %v118 = vunpack.c.0.s8 %v117
    %v119 = vlaneseq
    %v120 = vshrl.u32 %v119, 7
    %v121 = vsub.s32 %v118, %v120
    %v122 = vrot.slane %v106, %v121
    %v124 = vunpack.c.l.s4 1983009808
    %v125 = vunpack.c.0.s8 %v124
    %v126 = vlaneseq
    %v127 = vshrl.u32 %v126, 7
    %v128 = vsub.s32 %v125, %v127
    %v129 = vrot.slane %v107, %v128
    %v131 = vunpack.c.l.s4 1983009808
    %v132 = vunpack.c.0.s8 %v131
    %v133 = vlaneseq
    %v134 = vshrl.u32 %v133, 7
    %v135 = vsub.s32 %v132, %v134
    %v136 = vrot.slane %v108, %v135
    %v137 = vcombine.low %v115, %v129
    %v138 = vcombine.high %v115, %v129
    %v139 = vcombine.low %v122, %v136
    %v140 = vcombine.high %v122, %v136
    %v141 = vcombine.low %v82, %v85
    %v142 = vcombine.high %v82, %v85
    %v143 = vcombine.low %v88, %v91
    %v144 = vcombine.high %v88, %v91
    %v146 = vunpack.c.l.s4 1983009808
    %v147 = vunpack.c.0.s8 %v146
    %v148 = vlaneseq
    %v149 = vshrl.u32 %v148, 7
    %v150 = vsub.s32 %v147, %v149
    %v151 = vrot.slane %v141, %v150
    %v153 = vunpack.c.l.s4 1983009808
    %v154 = vunpack.c.0.s8 %v153
    %v155 = vlaneseq
    %v156 = vshrl.u32 %v155, 7
    %v157 = vsub.s32 %v154, %v156
    %v158 = vrot.slane %v142, %v157
    %v160 = vunpack.c.l.s4 1983009808
    %v161 = vunpack.c.0.s8 %v160
    %v162 = vlaneseq
    %v163 = vshrl.u32 %v162, 7
    %v164 = vsub.s32 %v161, %v163
    %v165 = vrot.slane %v143, %v164
    %v167 = vunpack.c.l.s4 1983009808
    %v168 = vunpack.c.0.s8 %v167
    %v169 = vlaneseq
    %v170 = vshrl.u32 %v169, 7
    %v171 = vsub.s32 %v168, %v170
    %v172 = vrot.slane %v144, %v171
    %v173 = vcombine.low %v151, %v165
    %v174 = vcombine.high %v151, %v165
    %v175 = vcombine.low %v158, %v172
    %v176 = vcombine.high %v158, %v172
    %v177 = vcombine.low %v83, %v86
    %v178 = vcombine.high %v83, %v86
    %v179 = vcombine.low %v89, %v92
    %v180 = vcombine.high %v89, %v92
    %v182 = vunpack.c.l.s4 1983009808
    %v183 = vunpack.c.0.s8 %v182
    %v184 = vlaneseq
    %v185 = vshrl.u32 %v184, 7
    %v186 = vsub.s32 %v183, %v185
    %v187 = vrot.slane %v177, %v186
    %v189 = vunpack.c.l.s4 1983009808
    %v190 = vunpack.c.0.s8 %v189
    %v191 = vlaneseq
    %v192 = vshrl.u32 %v191, 7
    %v193 = vsub.s32 %v190, %v192
    %v194 = vrot.slane %v178, %v193
    %v196 = vunpack.c.l.s4 1983009808
    %v197 = vunpack.c.0.s8 %v196
    %v198 = vlaneseq
    %v199 = vshrl.u32 %v198, 7
    %v200 = vsub.s32 %v197, %v199
    %v201 = vrot.slane %v179, %v200
    %v203 = vunpack.c.l.s4 1983009808
    %v204 = vunpack.c.0.s8 %v203
    %v205 = vlaneseq
    %v206 = vshrl.u32 %v205, 7
    %v207 = vsub.s32 %v204, %v206
    %v208 = vrot.slane %v180, %v207
    %v209 = vcombine.low %v187, %v201
    %v210 = vcombine.high %v187, %v201
    %v211 = vcombine.low %v194, %v208
    %v212 = vcombine.high %v194, %v208
    %v225 = vpack.c.bf16 %v137, %v137
    %v226 = vpack.c.bf16 %v138, %v138
    %v227 = vpack.c.bf16 %v139, %v139
    %v228 = vpack.c.bf16 %v140, %v140
    %v229 = vpack.c.bf16 %v173, %v173
    %v230 = vpack.c.bf16 %v174, %v174
    %v231 = vpack.c.bf16 %v175, %v175
    %v232 = vpack.c.bf16 %v176, %v176
    %v233 = vpack.c.bf16 %v209, %v209
    %v234 = vpack.c.bf16 %v210, %v210
    %v235 = vpack.c.bf16 %v211, %v211
    %v236 = vpack.c.bf16 %v212, %v212
    %v237 = vld [vmem:[%s1] sm:$0xf]
    %v238 = vld [vmem:[%s1 + $0x4] sm:$0xf]
    %v239 = vld [vmem:[%s1 + $0x8] sm:$0xf]
    %v240 = vld [vmem:[%s1 + $0xc] sm:$0xf]
    %v241 = vld [vmem:[%s1 + $0x10] sm:$0xf]
    %v242 = vld [vmem:[%s1 + $0x14] sm:$0xf]
    %v243 = vld [vmem:[%s1 + $0x18] sm:$0xf]
    %v244 = vld [vmem:[%s1 + $0x1c] sm:$0xf]
    %v245 = vld [vmem:[%s1 + $0x20] sm:$0xf]
    %v246 = vld [vmem:[%s1 + $0x24] sm:$0xf]
    %v247 = vld [vmem:[%s1 + $0x28] sm:$0xf]
    %v248 = vld [vmem:[%s1 + $0x2c] sm:$0xf]
    %v249 = vld [vmem:[%s1 + $0x30] sm:$0xf]
    %v250 = vld [vmem:[%s1 + $0x34] sm:$0xf]
    %v251 = vld [vmem:[%s1 + $0x38] sm:$0xf]
    %v252 = vld [vmem:[%s1 + $0x3c] sm:$0xf]
    %v253 = vld [vmem:[%s1 + $0x40] sm:$0xf]
    %v254 = vld [vmem:[%s1 + $0x44] sm:$0xf]
    %v255 = vld [vmem:[%s1 + $0x48] sm:$0xf]
    %v256 = vld [vmem:[%s1 + $0x4c] sm:$0xf]
    %v257 = vld [vmem:[%s1 + $0x50] sm:$0xf]
    %v258 = vld [vmem:[%s1 + $0x54] sm:$0xf]
    %v259 = vld [vmem:[%s1 + $0x58] sm:$0xf]
    %v260 = vld [vmem:[%s1 + $0x5c] sm:$0xf]
    %v261 = vld [vmem:[%s1 + $0x60] sm:$0xf]
    %v262 = vld [vmem:[%s1 + $0x64] sm:$0xf]
    %v263 = vld [vmem:[%s1 + $0x68] sm:$0xf]
    %v264 = vld [vmem:[%s1 + $0x6c] sm:$0xf]
    %v265 = vld [vmem:[%s1 + $0x70] sm:$0xf]
    %v266 = vld [vmem:[%s1 + $0x74] sm:$0xf]
    %v267 = vld [vmem:[%s1 + $0x78] sm:$0xf]
    %v268 = vld [vmem:[%s1 + $0x7c] sm:$0xf]
    %v269 = vld [vmem:[%s1 + $0x80] sm:$0xf]
    %v270 = vld [vmem:[%s1 + $0x84] sm:$0xf]
    %v271 = vld [vmem:[%s1 + $0x88] sm:$0xf]
    %v272 = vld [vmem:[%s1 + $0x8c] sm:$0xf]
    %v273 = vld [vmem:[%s1 + $0x90] sm:$0xf]
    %v274 = vld [vmem:[%s1 + $0x94] sm:$0xf]
    %v275 = vld [vmem:[%s1 + $0x98] sm:$0xf]
    %v276 = vld [vmem:[%s1 + $0x9c] sm:$0xf]
    %v277 = vld [vmem:[%s1 + $0xa0] sm:$0xf]
    %v278 = vld [vmem:[%s1 + $0xa4] sm:$0xf]
    %v279 = vld [vmem:[%s1 + $0xa8] sm:$0xf]
    %v280 = vld [vmem:[%s1 + $0xac] sm:$0xf]
    %v281 = vld [vmem:[%s1 + $0xb0] sm:$0xf]
    %v282 = vld [vmem:[%s1 + $0xb4] sm:$0xf]
    %v283 = vld [vmem:[%s1 + $0xb8] sm:$0xf]
    %v284 = vld [vmem:[%s1 + $0xbc] sm:$0xf]
    %v285 = vld [vmem:[%s1 + $0xc0] sm:$0xf]
    %v286 = vld [vmem:[%s1 + $0xc4] sm:$0xf]
    %v287 = vld [vmem:[%s1 + $0xc8] sm:$0xf]
    %v288 = vld [vmem:[%s1 + $0xcc] sm:$0xf]
    %v289 = vld [vmem:[%s1 + $0xd0] sm:$0xf]
    %v290 = vld [vmem:[%s1 + $0xd4] sm:$0xf]
    %v291 = vld [vmem:[%s1 + $0xd8] sm:$0xf]
    %v292 = vld [vmem:[%s1 + $0xdc] sm:$0xf]
    %v293 = vld [vmem:[%s1 + $0xe0] sm:$0xf]
    %v294 = vld [vmem:[%s1 + $0xe4] sm:$0xf]
    %v295 = vld [vmem:[%s1 + $0xe8] sm:$0xf]
    %v296 = vld [vmem:[%s1 + $0xec] sm:$0xf]
    %v297 = vld [vmem:[%s1 + $0xf0] sm:$0xf]
    %v298 = vld [vmem:[%s1 + $0xf4] sm:$0xf]
    %v299 = vld [vmem:[%s1 + $0xf8] sm:$0xf]
    %v300 = vld [vmem:[%s1 + $0xfc] sm:$0xf]
    %v301 = vld [vmem:[%s1 + $0x100] sm:$0xf]
    %v302 = vld [vmem:[%s1 + $0x104] sm:$0xf]
    %v303 = vld [vmem:[%s1 + $0x108] sm:$0xf]
    %v304 = vld [vmem:[%s1 + $0x10c] sm:$0xf]
    %v305 = vld [vmem:[%s1 + $0x110] sm:$0xf]
    %v306 = vld [vmem:[%s1 + $0x114] sm:$0xf]
    %v307 = vld [vmem:[%s1 + $0x118] sm:$0xf]
    %v308 = vld [vmem:[%s1 + $0x11c] sm:$0xf]
    %v309 = vld [vmem:[%s1 + $0x120] sm:$0xf]
    %v310 = vld [vmem:[%s1 + $0x124] sm:$0xf]
    %v311 = vld [vmem:[%s1 + $0x128] sm:$0xf]
    %v312 = vld [vmem:[%s1 + $0x12c] sm:$0xf]
    %v313 = vld [vmem:[%s1 + $0x130] sm:$0xf]
    %v314 = vld [vmem:[%s1 + $0x134] sm:$0xf]
    %v315 = vld [vmem:[%s1 + $0x138] sm:$0xf]
    %v316 = vld [vmem:[%s1 + $0x13c] sm:$0xf]
    %v317 = vld [vmem:[%s1 + $0x140] sm:$0xf]
    %v318 = vld [vmem:[%s1 + $0x144] sm:$0xf]
    %v319 = vld [vmem:[%s1 + $0x148] sm:$0xf]
    %v320 = vld [vmem:[%s1 + $0x14c] sm:$0xf]
    %v321 = vld [vmem:[%s1 + $0x150] sm:$0xf]
    %v322 = vld [vmem:[%s1 + $0x154] sm:$0xf]
    %v323 = vld [vmem:[%s1 + $0x158] sm:$0xf]
    %v324 = vld [vmem:[%s1 + $0x15c] sm:$0xf]
    %v325 = vld [vmem:[%s1 + $0x160] sm:$0xf]
    %v326 = vld [vmem:[%s1 + $0x164] sm:$0xf]
    %v327 = vld [vmem:[%s1 + $0x168] sm:$0xf]
    %v328 = vld [vmem:[%s1 + $0x16c] sm:$0xf]
    %v329 = vld [vmem:[%s1 + $0x170] sm:$0xf]
    %v330 = vld [vmem:[%s1 + $0x174] sm:$0xf]
    %v331 = vld [vmem:[%s1 + $0x178] sm:$0xf]
    %v332 = vld [vmem:[%s1 + $0x17c] sm:$0xf]
    %v333 = vld [vmem:[%s1 + $0x180] sm:$0xf]
    %v334 = vld [vmem:[%s1 + $0x184] sm:$0xf]
    %v335 = vld [vmem:[%s1 + $0x188] sm:$0xf]
    %v336 = vld [vmem:[%s1 + $0x18c] sm:$0xf]
    %v337 = vld [vmem:[%s1 + $0x190] sm:$0xf]
    %v338 = vld [vmem:[%s1 + $0x194] sm:$0xf]
    %v339 = vld [vmem:[%s1 + $0x198] sm:$0xf]
    %v340 = vld [vmem:[%s1 + $0x19c] sm:$0xf]
    %v341 = vld [vmem:[%s1 + $0x1a0] sm:$0xf]
    %v342 = vld [vmem:[%s1 + $0x1a4] sm:$0xf]
    %v343 = vld [vmem:[%s1 + $0x1a8] sm:$0xf]
    %v344 = vld [vmem:[%s1 + $0x1ac] sm:$0xf]
    %v345 = vld [vmem:[%s1 + $0x1b0] sm:$0xf]
    %v346 = vld [vmem:[%s1 + $0x1b4] sm:$0xf]
    %v347 = vld [vmem:[%s1 + $0x1b8] sm:$0xf]
    %v348 = vld [vmem:[%s1 + $0x1bc] sm:$0xf]
    %v349 = vld [vmem:[%s1 + $0x1c0] sm:$0xf]
    %v350 = vld [vmem:[%s1 + $0x1c4] sm:$0xf]
    %v351 = vld [vmem:[%s1 + $0x1c8] sm:$0xf]
    %v352 = vld [vmem:[%s1 + $0x1cc] sm:$0xf]
    %v353 = vld [vmem:[%s1 + $0x1d0] sm:$0xf]
    %v354 = vld [vmem:[%s1 + $0x1d4] sm:$0xf]
    %v355 = vld [vmem:[%s1 + $0x1d8] sm:$0xf]
    %v356 = vld [vmem:[%s1 + $0x1dc] sm:$0xf]
    %v357 = vld [vmem:[%s1 + $0x1e0] sm:$0xf]
    %v358 = vld [vmem:[%s1 + $0x1e4] sm:$0xf]
    %v359 = vld [vmem:[%s1 + $0x1e8] sm:$0xf]
    %v360 = vld [vmem:[%s1 + $0x1ec] sm:$0xf]
    %v361 = vld [vmem:[%s1 + $0x1f0] sm:$0xf]
    %v362 = vld [vmem:[%s1 + $0x1f4] sm:$0xf]
    %v363 = vld [vmem:[%s1 + $0x1f8] sm:$0xf]
    %v364 = vld [vmem:[%s1 + $0x1fc] sm:$0xf]
    %v365 = vld [vmem:[%s1 + $0x200] sm:$0xf]
    %v366 = vld [vmem:[%s1 + $0x204] sm:$0xf]
    %v367 = vld [vmem:[%s1 + $0x208] sm:$0xf]
    %v368 = vld [vmem:[%s1 + $0x20c] sm:$0xf]
    %v369 = vld [vmem:[%s1 + $0x210] sm:$0xf]
    %v370 = vld [vmem:[%s1 + $0x214] sm:$0xf]
    %v371 = vld [vmem:[%s1 + $0x218] sm:$0xf]
    %v372 = vld [vmem:[%s1 + $0x21c] sm:$0xf]
    %v373 = vld [vmem:[%s1 + $0x220] sm:$0xf]
    %v374 = vld [vmem:[%s1 + $0x224] sm:$0xf]
    %v375 = vld [vmem:[%s1 + $0x228] sm:$0xf]
    %v376 = vld [vmem:[%s1 + $0x22c] sm:$0xf]
    %v377 = vld [vmem:[%s1 + $0x230] sm:$0xf]
    %v378 = vld [vmem:[%s1 + $0x234] sm:$0xf]
    %v379 = vld [vmem:[%s1 + $0x238] sm:$0xf]
    %v380 = vld [vmem:[%s1 + $0x23c] sm:$0xf]
    %v381 = vld [vmem:[%s1 + $0x240] sm:$0xf]
    %v382 = vld [vmem:[%s1 + $0x244] sm:$0xf]
    %v383 = vld [vmem:[%s1 + $0x248] sm:$0xf]
    %v384 = vld [vmem:[%s1 + $0x24c] sm:$0xf]
    %v385 = vld [vmem:[%s1 + $0x250] sm:$0xf]
    %v386 = vld [vmem:[%s1 + $0x254] sm:$0xf]
    %v387 = vld [vmem:[%s1 + $0x258] sm:$0xf]
    %v388 = vld [vmem:[%s1 + $0x25c] sm:$0xf]
    %v389 = vld [vmem:[%s1 + $0x260] sm:$0xf]
    %v390 = vld [vmem:[%s1 + $0x264] sm:$0xf]
    %v391 = vld [vmem:[%s1 + $0x268] sm:$0xf]
    %v392 = vld [vmem:[%s1 + $0x26c] sm:$0xf]
    %v393 = vld [vmem:[%s1 + $0x270] sm:$0xf]
    %v394 = vld [vmem:[%s1 + $0x274] sm:$0xf]
    %v395 = vld [vmem:[%s1 + $0x278] sm:$0xf]
    %v396 = vld [vmem:[%s1 + $0x27c] sm:$0xf]
    %v397 = vld [vmem:[%s1 + $0x280] sm:$0xf]
    %v398 = vld [vmem:[%s1 + $0x284] sm:$0xf]
    %v399 = vld [vmem:[%s1 + $0x288] sm:$0xf]
    %v400 = vld [vmem:[%s1 + $0x28c] sm:$0xf]
    %v401 = vld [vmem:[%s1 + $0x290] sm:$0xf]
    %v402 = vld [vmem:[%s1 + $0x294] sm:$0xf]
    %v403 = vld [vmem:[%s1 + $0x298] sm:$0xf]
    %v404 = vld [vmem:[%s1 + $0x29c] sm:$0xf]
    %v405 = vld [vmem:[%s1 + $0x2a0] sm:$0xf]
    %v406 = vld [vmem:[%s1 + $0x2a4] sm:$0xf]
    %v407 = vld [vmem:[%s1 + $0x2a8] sm:$0xf]
    %v408 = vld [vmem:[%s1 + $0x2ac] sm:$0xf]
    %v409 = vld [vmem:[%s1 + $0x2b0] sm:$0xf]
    %v410 = vld [vmem:[%s1 + $0x2b4] sm:$0xf]
    %v411 = vld [vmem:[%s1 + $0x2b8] sm:$0xf]
    %v412 = vld [vmem:[%s1 + $0x2bc] sm:$0xf]
    %v413 = vld [vmem:[%s1 + $0x2c0] sm:$0xf]
    %v414 = vld [vmem:[%s1 + $0x2c4] sm:$0xf]
    %v415 = vld [vmem:[%s1 + $0x2c8] sm:$0xf]
    %v416 = vld [vmem:[%s1 + $0x2cc] sm:$0xf]
    %v417 = vld [vmem:[%s1 + $0x2d0] sm:$0xf]
    %v418 = vld [vmem:[%s1 + $0x2d4] sm:$0xf]
    %v419 = vld [vmem:[%s1 + $0x2d8] sm:$0xf]
    %v420 = vld [vmem:[%s1 + $0x2dc] sm:$0xf]
    %v421 = vld [vmem:[%s1 + $0x2e0] sm:$0xf]
    %v422 = vld [vmem:[%s1 + $0x2e4] sm:$0xf]
    %v423 = vld [vmem:[%s1 + $0x2e8] sm:$0xf]
    %v424 = vld [vmem:[%s1 + $0x2ec] sm:$0xf]
    %v425 = vld [vmem:[%s1 + $0x2f0] sm:$0xf]
    %v426 = vld [vmem:[%s1 + $0x2f4] sm:$0xf]
    %v427 = vld [vmem:[%s1 + $0x2f8] sm:$0xf]
    %v428 = vld [vmem:[%s1 + $0x2fc] sm:$0xf]
    %v429 = vld [vmem:[%s2] sm:$0x1]
    %v431 = vlaneseq
    %v432 = vshrl.u32 %v431, 7
    %v433 = vsub.s32 0, %v432
    %v434 = vrot.slane %v429, %v433
    %v628 = vunpack.c.l.b16 %v237
    %v629 = vunpack.c.l.b16 %v238
    %v630 = vunpack.c.l.b16 %v239
    %v631 = vunpack.c.l.b16 %v240
    %v632 = vunpack.c.l.b16 %v241
    %v633 = vunpack.c.l.b16 %v242
    %v634 = vunpack.c.l.b16 %v243
    %v635 = vunpack.c.l.b16 %v244
    %v636 = vunpack.c.l.b16 %v245
    %v637 = vunpack.c.l.b16 %v246
    %v638 = vunpack.c.l.b16 %v247
    %v639 = vunpack.c.l.b16 %v248
    %v640 = vunpack.c.l.b16 %v249
    %v641 = vunpack.c.l.b16 %v250
    %v642 = vunpack.c.l.b16 %v251
    %v643 = vunpack.c.l.b16 %v252
    %v644 = vunpack.c.l.b16 %v253
    %v645 = vunpack.c.l.b16 %v254
    %v646 = vunpack.c.l.b16 %v255
    %v647 = vunpack.c.l.b16 %v256
    %v648 = vunpack.c.l.b16 %v257
    %v649 = vunpack.c.l.b16 %v258
    %v650 = vunpack.c.l.b16 %v259
    %v651 = vunpack.c.l.b16 %v260
    %v652 = vunpack.c.l.b16 %v261
    %v653 = vunpack.c.l.b16 %v262
    %v654 = vunpack.c.l.b16 %v263
    %v655 = vunpack.c.l.b16 %v264
    %v656 = vunpack.c.l.b16 %v265
    %v657 = vunpack.c.l.b16 %v266
    %v658 = vunpack.c.l.b16 %v267
    %v659 = vunpack.c.l.b16 %v268
    %v660 = vunpack.c.l.b16 %v269
    %v661 = vunpack.c.l.b16 %v270
    %v662 = vunpack.c.l.b16 %v271
    %v663 = vunpack.c.l.b16 %v272
    %v664 = vunpack.c.l.b16 %v273
    %v665 = vunpack.c.l.b16 %v274
    %v666 = vunpack.c.l.b16 %v275
    %v667 = vunpack.c.l.b16 %v276
    %v668 = vunpack.c.l.b16 %v277
    %v669 = vunpack.c.l.b16 %v278
    %v670 = vunpack.c.l.b16 %v279
    %v671 = vunpack.c.l.b16 %v280
    %v672 = vunpack.c.l.b16 %v281
    %v673 = vunpack.c.l.b16 %v282
    %v674 = vunpack.c.l.b16 %v283
    %v675 = vunpack.c.l.b16 %v284
    %v676 = vunpack.c.l.b16 %v285
    %v677 = vunpack.c.l.b16 %v286
    %v678 = vunpack.c.l.b16 %v287
    %v679 = vunpack.c.l.b16 %v288
    %v680 = vunpack.c.l.b16 %v289
    %v681 = vunpack.c.l.b16 %v290
    %v682 = vunpack.c.l.b16 %v291
    %v683 = vunpack.c.l.b16 %v292
    %v684 = vunpack.c.l.b16 %v293
    %v685 = vunpack.c.l.b16 %v294
    %v686 = vunpack.c.l.b16 %v295
    %v687 = vunpack.c.l.b16 %v296
    %v688 = vunpack.c.l.b16 %v297
    %v689 = vunpack.c.l.b16 %v298
    %v690 = vunpack.c.l.b16 %v299
    %v691 = vunpack.c.l.b16 %v300
    %v692 = vunpack.c.l.b16 %v301
    %v693 = vunpack.c.l.b16 %v302
    %v694 = vunpack.c.l.b16 %v303
    %v695 = vunpack.c.l.b16 %v304
    %v696 = vunpack.c.l.b16 %v305
    %v697 = vunpack.c.l.b16 %v306
    %v698 = vunpack.c.l.b16 %v307
    %v699 = vunpack.c.l.b16 %v308
    %v700 = vunpack.c.l.b16 %v309
    %v701 = vunpack.c.l.b16 %v310
    %v702 = vunpack.c.l.b16 %v311
    %v703 = vunpack.c.l.b16 %v312
    %v704 = vunpack.c.l.b16 %v313
    %v705 = vunpack.c.l.b16 %v314
    %v706 = vunpack.c.l.b16 %v315
    %v707 = vunpack.c.l.b16 %v316
    %v708 = vunpack.c.l.b16 %v317
    %v709 = vunpack.c.l.b16 %v318
    %v710 = vunpack.c.l.b16 %v319
    %v711 = vunpack.c.l.b16 %v320
    %v712 = vunpack.c.l.b16 %v321
    %v713 = vunpack.c.l.b16 %v322
    %v714 = vunpack.c.l.b16 %v323
    %v715 = vunpack.c.l.b16 %v324
    %v716 = vunpack.c.l.b16 %v325
    %v717 = vunpack.c.l.b16 %v326
    %v718 = vunpack.c.l.b16 %v327
    %v719 = vunpack.c.l.b16 %v328
    %v720 = vunpack.c.l.b16 %v329
    %v721 = vunpack.c.l.b16 %v330
    %v722 = vunpack.c.l.b16 %v331
    %v723 = vunpack.c.l.b16 %v332
    %v724 = vunpack.c.l.b16 %v333
    %v725 = vunpack.c.l.b16 %v334
    %v726 = vunpack.c.l.b16 %v335
    %v727 = vunpack.c.l.b16 %v336
    %v728 = vunpack.c.l.b16 %v337
    %v729 = vunpack.c.l.b16 %v338
    %v730 = vunpack.c.l.b16 %v339
    %v731 = vunpack.c.l.b16 %v340
    %v732 = vunpack.c.l.b16 %v341
    %v733 = vunpack.c.l.b16 %v342
    %v734 = vunpack.c.l.b16 %v343
    %v735 = vunpack.c.l.b16 %v344
    %v736 = vunpack.c.l.b16 %v345
    %v737 = vunpack.c.l.b16 %v346
    %v738 = vunpack.c.l.b16 %v347
    %v739 = vunpack.c.l.b16 %v348
    %v740 = vunpack.c.l.b16 %v349
    %v741 = vunpack.c.l.b16 %v350
    %v742 = vunpack.c.l.b16 %v351
    %v743 = vunpack.c.l.b16 %v352
    %v744 = vunpack.c.l.b16 %v353
    %v745 = vunpack.c.l.b16 %v354
    %v746 = vunpack.c.l.b16 %v355
    %v747 = vunpack.c.l.b16 %v356
    %v748 = vunpack.c.l.b16 %v357
    %v749 = vunpack.c.l.b16 %v358
    %v750 = vunpack.c.l.b16 %v359
    %v751 = vunpack.c.l.b16 %v360
    %v752 = vunpack.c.l.b16 %v361
    %v753 = vunpack.c.l.b16 %v362
    %v754 = vunpack.c.l.b16 %v363
    %v755 = vunpack.c.l.b16 %v364
    %v756 = vunpack.c.l.b16 %v365
    %v757 = vunpack.c.l.b16 %v366
    %v758 = vunpack.c.l.b16 %v367
    %v759 = vunpack.c.l.b16 %v368
    %v760 = vunpack.c.l.b16 %v369
    %v761 = vunpack.c.l.b16 %v370
    %v762 = vunpack.c.l.b16 %v371
    %v763 = vunpack.c.l.b16 %v372
    %v764 = vunpack.c.l.b16 %v373
    %v765 = vunpack.c.l.b16 %v374
    %v766 = vunpack.c.l.b16 %v375
    %v767 = vunpack.c.l.b16 %v376
    %v768 = vunpack.c.l.b16 %v377
    %v769 = vunpack.c.l.b16 %v378
    %v770 = vunpack.c.l.b16 %v379
    %v771 = vunpack.c.l.b16 %v380
    %v772 = vunpack.c.l.b16 %v381
    %v773 = vunpack.c.l.b16 %v382
    %v774 = vunpack.c.l.b16 %v383
    %v775 = vunpack.c.l.b16 %v384
    %v776 = vunpack.c.l.b16 %v385
    %v777 = vunpack.c.l.b16 %v386
    %v778 = vunpack.c.l.b16 %v387
    %v779 = vunpack.c.l.b16 %v388
    %v780 = vunpack.c.l.b16 %v389
    %v781 = vunpack.c.l.b16 %v390
    %v782 = vunpack.c.l.b16 %v391
    %v783 = vunpack.c.l.b16 %v392
    %v784 = vunpack.c.l.b16 %v393
    %v785 = vunpack.c.l.b16 %v394
    %v786 = vunpack.c.l.b16 %v395
    %v787 = vunpack.c.l.b16 %v396
    %v788 = vunpack.c.l.b16 %v397
    %v789 = vunpack.c.l.b16 %v398
    %v790 = vunpack.c.l.b16 %v399
    %v791 = vunpack.c.l.b16 %v400
    %v792 = vunpack.c.l.b16 %v401
    %v793 = vunpack.c.l.b16 %v402
    %v794 = vunpack.c.l.b16 %v403
    %v795 = vunpack.c.l.b16 %v404
    %v796 = vunpack.c.l.b16 %v405
    %v797 = vunpack.c.l.b16 %v406
    %v798 = vunpack.c.l.b16 %v407
    %v799 = vunpack.c.l.b16 %v408
    %v800 = vunpack.c.l.b16 %v409
    %v801 = vunpack.c.l.b16 %v410
    %v802 = vunpack.c.l.b16 %v411
    %v803 = vunpack.c.l.b16 %v412
    %v804 = vunpack.c.l.b16 %v413
    %v805 = vunpack.c.l.b16 %v414
    %v806 = vunpack.c.l.b16 %v415
    %v807 = vunpack.c.l.b16 %v416
    %v808 = vunpack.c.l.b16 %v417
    %v809 = vunpack.c.l.b16 %v418
    %v810 = vunpack.c.l.b16 %v419
    %v811 = vunpack.c.l.b16 %v420
    %v812 = vunpack.c.l.b16 %v421
    %v813 = vunpack.c.l.b16 %v422
    %v814 = vunpack.c.l.b16 %v423
    %v815 = vunpack.c.l.b16 %v424
    %v816 = vunpack.c.l.b16 %v425
    %v817 = vunpack.c.l.b16 %v426
    %v818 = vunpack.c.l.b16 %v427
    %v819 = vunpack.c.l.b16 %v428
    %v820 = vpack.c.b16 %v629, %v628
    %v821 = vpack.c.b16 %v631, %v630
    %v822 = vpack.c.b16 %v633, %v632
    %v823 = vpack.c.b16 %v635, %v634
    %v824 = vpack.c.b16 %v637, %v636
    %v825 = vpack.c.b16 %v639, %v638
    %v826 = vpack.c.b16 %v641, %v640
    %v827 = vpack.c.b16 %v643, %v642
    %v828 = vpack.c.b16 %v645, %v644
    %v829 = vpack.c.b16 %v647, %v646
    %v830 = vpack.c.b16 %v649, %v648
    %v831 = vpack.c.b16 %v651, %v650
    %v832 = vpack.c.b16 %v653, %v652
    %v833 = vpack.c.b16 %v655, %v654
    %v834 = vpack.c.b16 %v657, %v656
    %v835 = vpack.c.b16 %v659, %v658
    %v836 = vpack.c.b16 %v661, %v660
    %v837 = vpack.c.b16 %v663, %v662
    %v838 = vpack.c.b16 %v665, %v664
    %v839 = vpack.c.b16 %v667, %v666
    %v840 = vpack.c.b16 %v669, %v668
    %v841 = vpack.c.b16 %v671, %v670
    %v842 = vpack.c.b16 %v673, %v672
    %v843 = vpack.c.b16 %v675, %v674
    %v844 = vpack.c.b16 %v677, %v676
    %v845 = vpack.c.b16 %v679, %v678
    %v846 = vpack.c.b16 %v681, %v680
    %v847 = vpack.c.b16 %v683, %v682
    %v848 = vpack.c.b16 %v685, %v684
    %v849 = vpack.c.b16 %v687, %v686
    %v850 = vpack.c.b16 %v689, %v688
    %v851 = vpack.c.b16 %v691, %v690
    %v852 = vpack.c.b16 %v693, %v692
    %v853 = vpack.c.b16 %v695, %v694
    %v854 = vpack.c.b16 %v697, %v696
    %v855 = vpack.c.b16 %v699, %v698
    %v856 = vpack.c.b16 %v701, %v700
    %v857 = vpack.c.b16 %v703, %v702
    %v858 = vpack.c.b16 %v705, %v704
    %v859 = vpack.c.b16 %v707, %v706
    %v860 = vpack.c.b16 %v709, %v708
    %v861 = vpack.c.b16 %v711, %v710
    %v862 = vpack.c.b16 %v713, %v712
    %v863 = vpack.c.b16 %v715, %v714
    %v864 = vpack.c.b16 %v717, %v716
    %v865 = vpack.c.b16 %v719, %v718
    %v866 = vpack.c.b16 %v721, %v720
    %v867 = vpack.c.b16 %v723, %v722
    %v868 = vpack.c.b16 %v725, %v724
    %v869 = vpack.c.b16 %v727, %v726
    %v870 = vpack.c.b16 %v729, %v728
    %v871 = vpack.c.b16 %v731, %v730
    %v872 = vpack.c.b16 %v733, %v732
    %v873 = vpack.c.b16 %v735, %v734
    %v874 = vpack.c.b16 %v737, %v736
    %v875 = vpack.c.b16 %v739, %v738
    %v876 = vpack.c.b16 %v741, %v740
    %v877 = vpack.c.b16 %v743, %v742
    %v878 = vpack.c.b16 %v745, %v744
    %v879 = vpack.c.b16 %v747, %v746
    %v880 = vpack.c.b16 %v749, %v748
    %v881 = vpack.c.b16 %v751, %v750
    %v882 = vpack.c.b16 %v753, %v752
    %v883 = vpack.c.b16 %v755, %v754
    %v884 = vpack.c.b16 %v757, %v756
    %v885 = vpack.c.b16 %v759, %v758
    %v886 = vpack.c.b16 %v761, %v760
    %v887 = vpack.c.b16 %v763, %v762
    %v888 = vpack.c.b16 %v765, %v764
    %v889 = vpack.c.b16 %v767, %v766
    %v890 = vpack.c.b16 %v769, %v768
    %v891 = vpack.c.b16 %v771, %v770
    %v892 = vpack.c.b16 %v773, %v772
    %v893 = vpack.c.b16 %v775, %v774
    %v894 = vpack.c.b16 %v777, %v776
    %v895 = vpack.c.b16 %v779, %v778
    %v896 = vpack.c.b16 %v781, %v780
    %v897 = vpack.c.b16 %v783, %v782
    %v898 = vpack.c.b16 %v785, %v784
    %v899 = vpack.c.b16 %v787, %v786
    %v900 = vpack.c.b16 %v789, %v788
    %v901 = vpack.c.b16 %v791, %v790
    %v902 = vpack.c.b16 %v793, %v792
    %v903 = vpack.c.b16 %v795, %v794
    %v904 = vpack.c.b16 %v797, %v796
    %v905 = vpack.c.b16 %v799, %v798
    %v906 = vpack.c.b16 %v801, %v800
    %v907 = vpack.c.b16 %v803, %v802
    %v908 = vpack.c.b16 %v805, %v804
    %v909 = vpack.c.b16 %v807, %v806
    %v910 = vpack.c.b16 %v809, %v808
    %v911 = vpack.c.b16 %v811, %v810
    %v912 = vpack.c.b16 %v813, %v812
    %v913 = vpack.c.b16 %v815, %v814
    %v914 = vpack.c.b16 %v817, %v816
    %v915 = vpack.c.b16 %v819, %v818
    %1012 = vmatprep.subr.bf16.mxu0 0
    %1013 = vmatpush1.bf16.msra.mxu0 %v820
    %1014 = vmatprep.subr.bf16.mxu0 0
    %1015 = vmatpush1.bf16.msra.mxu0 %v821
    %1016 = vmatprep.subr.bf16.mxu0 0
    %1017 = vmatpush1.bf16.msra.mxu0 %v822
    %1018 = vmatprep.subr.bf16.mxu0 0
    %1019 = vmatpush1.bf16.msra.mxu0 %v823
    %1020 = vmatprep.subr.bf16.mxu0 0
    %1021 = vmatpush1.bf16.msra.mxu0 %v824
    %1022 = vmatprep.subr.bf16.mxu0 0
    %1023 = vmatpush1.bf16.msra.mxu0 %v825
    %1024 = vmatprep.subr.bf16.mxu0 0
    %1025 = vmatpush1.bf16.msra.mxu0 %v826
    %1026 = vmatprep.subr.bf16.mxu0 0
    %1027 = vmatpush1.bf16.msra.mxu0 %v827
    %1028 = vmatprep.subr.bf16.mxu0 0
    %1029 = vmatpush1.bf16.msra.mxu0 %v828
    %1030 = vmatprep.subr.bf16.mxu0 0
    %1031 = vmatpush1.bf16.msra.mxu0 %v829
    %1032 = vmatprep.subr.bf16.mxu0 0
    %1033 = vmatpush1.bf16.msra.mxu0 %v830
    %1034 = vmatprep.subr.bf16.mxu0 0
    %1035 = vmatpush1.bf16.msra.mxu0 %v831
    %1036 = vmatprep.subr.bf16.mxu0 0
    %1037 = vmatpush1.bf16.msra.mxu0 %v832
    %1038 = vmatprep.subr.bf16.mxu0 0
    %1039 = vmatpush1.bf16.msra.mxu0 %v833
    %1040 = vmatprep.subr.bf16.mxu0 0
    %1041 = vmatpush1.bf16.msra.mxu0 %v834
    %1042 = vmatprep.subr.bf16.mxu0 0
    %1043 = vmatpush1.bf16.msra.mxu0 %v835
    %1044 = vmatprep.mubr.bf16.mxu0 %v226
    %1045 = vmatmul.mubr.bf16.gmra.mrb[0].mxu0 %v225
    %v1046 = vpop.f32.mrb[0].mxu0
    %v1047 = vadd.f32 %v434, %v1046
    %v1048 = vpop.f32.mrb[0].mxu0
    %v1049 = vpop.f32.mrb[0].mxu0
    %v1050 = vpop.f32.mrb[0].mxu0
    %1051 = vdwg.mxu0
    %1052 = vmatprep.subr.bf16.mxu0 0
    %1053 = vmatpush1.bf16.msra.mxu0 %v836
    %1054 = vmatprep.subr.bf16.mxu0 0
    %1055 = vmatpush1.bf16.msra.mxu0 %v837
    %1056 = vmatprep.subr.bf16.mxu0 0
    %1057 = vmatpush1.bf16.msra.mxu0 %v838
    %1058 = vmatprep.subr.bf16.mxu0 0
    %1059 = vmatpush1.bf16.msra.mxu0 %v839
    %1060 = vmatprep.subr.bf16.mxu0 0
    %1061 = vmatpush1.bf16.msra.mxu0 %v840
    %1062 = vmatprep.subr.bf16.mxu0 0
    %1063 = vmatpush1.bf16.msra.mxu0 %v841
    %1064 = vmatprep.subr.bf16.mxu0 0
    %1065 = vmatpush1.bf16.msra.mxu0 %v842
    %1066 = vmatprep.subr.bf16.mxu0 0
    %1067 = vmatpush1.bf16.msra.mxu0 %v843
    %1068 = vmatprep.subr.bf16.mxu0 0
    %1069 = vmatpush1.bf16.msra.mxu0 %v844
    %1070 = vmatprep.subr.bf16.mxu0 0
    %1071 = vmatpush1.bf16.msra.mxu0 %v845
    %1072 = vmatprep.subr.bf16.mxu0 0
    %1073 = vmatpush1.bf16.msra.mxu0 %v846
    %1074 = vmatprep.subr.bf16.mxu0 0
    %1075 = vmatpush1.bf16.msra.mxu0 %v847
    %1076 = vmatprep.subr.bf16.mxu0 0
    %1077 = vmatpush1.bf16.msra.mxu0 %v848
    %1078 = vmatprep.subr.bf16.mxu0 0
    %1079 = vmatpush1.bf16.msra.mxu0 %v849
    %1080 = vmatprep.subr.bf16.mxu0 0
    %1081 = vmatpush1.bf16.msra.mxu0 %v850
    %1082 = vmatprep.subr.bf16.mxu0 0
    %1083 = vmatpush1.bf16.msra.mxu0 %v851
    %1084 = vmatprep.mubr.bf16.mxu0 %v228
    %1085 = vmatmul.mubr.bf16.gmra.mrb[0].mxu0 %v227
    %v1086 = vpop.f32.mrb[0].mxu0
    %v1087 = vadd.f32 %v1047, %v1086
    %v1088 = vpop.f32.mrb[0].mxu0
    %v1089 = vpop.f32.mrb[0].mxu0
    %v1090 = vpop.f32.mrb[0].mxu0
    %1091 = vdwg.mxu0
    %1092 = vmatprep.subr.bf16.mxu0 0
    %1093 = vmatpush1.bf16.msra.mxu0 %v852
    %1094 = vmatprep.subr.bf16.mxu0 0
    %1095 = vmatpush1.bf16.msra.mxu0 %v853
    %1096 = vmatprep.subr.bf16.mxu0 0
    %1097 = vmatpush1.bf16.msra.mxu0 %v854
    %1098 = vmatprep.subr.bf16.mxu0 0
    %1099 = vmatpush1.bf16.msra.mxu0 %v855
    %1100 = vmatprep.subr.bf16.mxu0 0
    %1101 = vmatpush1.bf16.msra.mxu0 %v856
    %1102 = vmatprep.subr.bf16.mxu0 0
    %1103 = vmatpush1.bf16.msra.mxu0 %v857
    %1104 = vmatprep.subr.bf16.mxu0 0
    %1105 = vmatpush1.bf16.msra.mxu0 %v858
    %1106 = vmatprep.subr.bf16.mxu0 0
    %1107 = vmatpush1.bf16.msra.mxu0 %v859
    %1108 = vmatprep.subr.bf16.mxu0 0
    %1109 = vmatpush1.bf16.msra.mxu0 %v860
    %1110 = vmatprep.subr.bf16.mxu0 0
    %1111 = vmatpush1.bf16.msra.mxu0 %v861
    %1112 = vmatprep.subr.bf16.mxu0 0
    %1113 = vmatpush1.bf16.msra.mxu0 %v862
    %1114 = vmatprep.subr.bf16.mxu0 0
    %1115 = vmatpush1.bf16.msra.mxu0 %v863
    %1116 = vmatprep.subr.bf16.mxu0 0
    %1117 = vmatpush1.bf16.msra.mxu0 %v864
    %1118 = vmatprep.subr.bf16.mxu0 0
    %1119 = vmatpush1.bf16.msra.mxu0 %v865
    %1120 = vmatprep.subr.bf16.mxu0 0
    %1121 = vmatpush1.bf16.msra.mxu0 %v866
    %1122 = vmatprep.subr.bf16.mxu0 0
    %1123 = vmatpush1.bf16.msra.mxu0 %v867
    %1124 = vmatprep.mubr.bf16.mxu0 %v230
    %1125 = vmatmul.mubr.bf16.gmra.mrb[0].mxu0 %v229
    %v1126 = vpop.f32.mrb[0].mxu0
    %v1127 = vadd.f32 %v1087, %v1126
    %v1128 = vpop.f32.mrb[0].mxu0
    %v1129 = vpop.f32.mrb[0].mxu0
    %v1130 = vpop.f32.mrb[0].mxu0
    %1131 = vdwg.mxu0
    %1132 = vmatprep.subr.bf16.mxu0 0
    %1133 = vmatpush1.bf16.msra.mxu0 %v868
    %1134 = vmatprep.subr.bf16.mxu0 0
    %1135 = vmatpush1.bf16.msra.mxu0 %v869
    %1136 = vmatprep.subr.bf16.mxu0 0
    %1137 = vmatpush1.bf16.msra.mxu0 %v870
    %1138 = vmatprep.subr.bf16.mxu0 0
    %1139 = vmatpush1.bf16.msra.mxu0 %v871
    %1140 = vmatprep.subr.bf16.mxu0 0
    %1141 = vmatpush1.bf16.msra.mxu0 %v872
    %1142 = vmatprep.subr.bf16.mxu0 0
    %1143 = vmatpush1.bf16.msra.mxu0 %v873
    %1144 = vmatprep.subr.bf16.mxu0 0
    %1145 = vmatpush1.bf16.msra.mxu0 %v874
    %1146 = vmatprep.subr.bf16.mxu0 0
    %1147 = vmatpush1.bf16.msra.mxu0 %v875
    %1148 = vmatprep.subr.bf16.mxu0 0
    %1149 = vmatpush1.bf16.msra.mxu0 %v876
    %1150 = vmatprep.subr.bf16.mxu0 0
    %1151 = vmatpush1.bf16.msra.mxu0 %v877
    %1152 = vmatprep.subr.bf16.mxu0 0
    %1153 = vmatpush1.bf16.msra.mxu0 %v878
    %1154 = vmatprep.subr.bf16.mxu0 0
    %1155 = vmatpush1.bf16.msra.mxu0 %v879
    %1156 = vmatprep.subr.bf16.mxu0 0
    %1157 = vmatpush1.bf16.msra.mxu0 %v880
    %1158 = vmatprep.subr.bf16.mxu0 0
    %1159 = vmatpush1.bf16.msra.mxu0 %v881
    %1160 = vmatprep.subr.bf16.mxu0 0
    %1161 = vmatpush1.bf16.msra.mxu0 %v882
    %1162 = vmatprep.subr.bf16.mxu0 0
    %1163 = vmatpush1.bf16.msra.mxu0 %v883
    %1164 = vmatprep.mubr.bf16.mxu0 %v232
    %1165 = vmatmul.mubr.bf16.gmra.mrb[0].mxu0 %v231
    %v1166 = vpop.f32.mrb[0].mxu0
    %v1167 = vadd.f32 %v1127, %v1166
    %v1168 = vpop.f32.mrb[0].mxu0
    %v1169 = vpop.f32.mrb[0].mxu0
    %v1170 = vpop.f32.mrb[0].mxu0
    %1171 = vdwg.mxu0
    %1172 = vmatprep.subr.bf16.mxu0 0
    %1173 = vmatpush1.bf16.msra.mxu0 %v884
    %1174 = vmatprep.subr.bf16.mxu0 0
    %1175 = vmatpush1.bf16.msra.mxu0 %v885
    %1176 = vmatprep.subr.bf16.mxu0 0
    %1177 = vmatpush1.bf16.msra.mxu0 %v886
    %1178 = vmatprep.subr.bf16.mxu0 0
    %1179 = vmatpush1.bf16.msra.mxu0 %v887
    %1180 = vmatprep.subr.bf16.mxu0 0
    %1181 = vmatpush1.bf16.msra.mxu0 %v888
    %1182 = vmatprep.subr.bf16.mxu0 0
    %1183 = vmatpush1.bf16.msra.mxu0 %v889
    %1184 = vmatprep.subr.bf16.mxu0 0
    %1185 = vmatpush1.bf16.msra.mxu0 %v890
    %1186 = vmatprep.subr.bf16.mxu0 0
    %1187 = vmatpush1.bf16.msra.mxu0 %v891
    %1188 = vmatprep.subr.bf16.mxu0 0
    %1189 = vmatpush1.bf16.msra.mxu0 %v892
    %1190 = vmatprep.subr.bf16.mxu0 0
    %1191 = vmatpush1.bf16.msra.mxu0 %v893
    %1192 = vmatprep.subr.bf16.mxu0 0
    %1193 = vmatpush1.bf16.msra.mxu0 %v894
    %1194 = vmatprep.subr.bf16.mxu0 0
    %1195 = vmatpush1.bf16.msra.mxu0 %v895
    %1196 = vmatprep.subr.bf16.mxu0 0
    %1197 = vmatpush1.bf16.msra.mxu0 %v896
    %1198 = vmatprep.subr.bf16.mxu0 0
    %1199 = vmatpush1.bf16.msra.mxu0 %v897
    %1200 = vmatprep.subr.bf16.mxu0 0
    %1201 = vmatpush1.bf16.msra.mxu0 %v898
    %1202 = vmatprep.subr.bf16.mxu0 0
    %1203 = vmatpush1.bf16.msra.mxu0 %v899
    %1204 = vmatprep.mubr.bf16.mxu0 %v234
    %1205 = vmatmul.mubr.bf16.gmra.mrb[0].mxu0 %v233
    %v1206 = vpop.f32.mrb[0].mxu0
    %v1207 = vadd.f32 %v1167, %v1206
    %v1208 = vpop.f32.mrb[0].mxu0
    %v1209 = vpop.f32.mrb[0].mxu0
    %v1210 = vpop.f32.mrb[0].mxu0
    %1211 = vdwg.mxu0
    %1212 = vmatprep.subr.bf16.mxu0 0
    %1213 = vmatpush1.bf16.msra.mxu0 %v900
    %1214 = vmatprep.subr.bf16.mxu0 0
    %1215 = vmatpush1.bf16.msra.mxu0 %v901
    %1216 = vmatprep.subr.bf16.mxu0 0
    %1217 = vmatpush1.bf16.msra.mxu0 %v902
    %1218 = vmatprep.subr.bf16.mxu0 0
    %1219 = vmatpush1.bf16.msra.mxu0 %v903
    %1220 = vmatprep.subr.bf16.mxu0 0
    %1221 = vmatpush1.bf16.msra.mxu0 %v904
    %1222 = vmatprep.subr.bf16.mxu0 0
    %1223 = vmatpush1.bf16.msra.mxu0 %v905
    %1224 = vmatprep.subr.bf16.mxu0 0
    %1225 = vmatpush1.bf16.msra.mxu0 %v906
    %1226 = vmatprep.subr.bf16.mxu0 0
    %1227 = vmatpush1.bf16.msra.mxu0 %v907
    %1228 = vmatprep.subr.bf16.mxu0 0
    %1229 = vmatpush1.bf16.msra.mxu0 %v908
    %1230 = vmatprep.subr.bf16.mxu0 0
    %1231 = vmatpush1.bf16.msra.mxu0 %v909
    %1232 = vmatprep.subr.bf16.mxu0 0
    %1233 = vmatpush1.bf16.msra.mxu0 %v910
    %1234 = vmatprep.subr.bf16.mxu0 0
    %1235 = vmatpush1.bf16.msra.mxu0 %v911
    %1236 = vmatprep.subr.bf16.mxu0 0
    %1237 = vmatpush1.bf16.msra.mxu0 %v912
    %1238 = vmatprep.subr.bf16.mxu0 0
    %1239 = vmatpush1.bf16.msra.mxu0 %v913
    %1240 = vmatprep.subr.bf16.mxu0 0
    %1241 = vmatpush1.bf16.msra.mxu0 %v914
    %1242 = vmatprep.subr.bf16.mxu0 0
    %1243 = vmatpush1.bf16.msra.mxu0 %v915
    %1244 = vmatprep.mubr.bf16.mxu0 %v236
    %1245 = vmatmul.mubr.bf16.gmra.mrb[0].mxu0 %v235
    %v1246 = vpop.f32.mrb[0].mxu0
    %v1247 = vadd.f32 %v1207, %v1246
    %v1248 = vpop.f32.mrb[0].mxu0
    %v1249 = vpop.f32.mrb[0].mxu0
    %v1250 = vpop.f32.mrb[0].mxu0
    %1251 = vdwg.mxu0
    %v1252 = vmax.f32 %v1247, 0.0
    %v1253 = vpack.c.bf16 %v1252, %v1252
    %v1254 = vld [vmem:[%s3] sm:$0xf]
    %v1255 = vld [vmem:[%s3 + $0x4] sm:$0xf]
    %v1256 = vld [vmem:[%s3 + $0x8] sm:$0xf]
    %v1257 = vld [vmem:[%s3 + $0xc] sm:$0xf]
    %v1258 = vld [vmem:[%s3 + $0x10] sm:$0xf]
    %v1259 = vld [vmem:[%s3 + $0x14] sm:$0xf]
    %v1260 = vld [vmem:[%s3 + $0x18] sm:$0xf]
    %v1261 = vld [vmem:[%s3 + $0x1c] sm:$0xf]
    %v1262 = vld [vmem:[%s3 + $0x20] sm:$0xf]
    %v1263 = vld [vmem:[%s3 + $0x24] sm:$0xf]
    %v1264 = vld [vmem:[%s3 + $0x28] sm:$0xf]
    %v1265 = vld [vmem:[%s3 + $0x2c] sm:$0xf]
    %v1266 = vld [vmem:[%s3 + $0x30] sm:$0xf]
    %v1267 = vld [vmem:[%s3 + $0x34] sm:$0xf]
    %v1268 = vld [vmem:[%s3 + $0x38] sm:$0xf]
    %v1269 = vld [vmem:[%s3 + $0x3c] sm:$0xf]
    %v1270 = vld [vmem:[%s4] sm:$0x1]
    %v1272 = vlaneseq
    %v1273 = vshrl.u32 %v1272, 7
    %v1274 = vsub.s32 0, %v1273
    %v1275 = vrot.slane %v1270, %v1274
    %v1293 = vunpack.c.l.b16 %v1254
    %v1294 = vunpack.c.l.b16 %v1255
    %v1295 = vunpack.c.l.b16 %v1256
    %v1296 = vunpack.c.l.b16 %v1257
    %v1297 = vunpack.c.l.b16 %v1258
    %v1298 = vunpack.c.l.b16 %v1259
    %v1299 = vunpack.c.l.b16 %v1260
    %v1300 = vunpack.c.l.b16 %v1261
    %v1301 = vunpack.c.l.b16 %v1262
    %v1302 = vunpack.c.l.b16 %v1263
    %v1303 = vunpack.c.l.b16 %v1264
    %v1304 = vunpack.c.l.b16 %v1265
    %v1305 = vunpack.c.l.b16 %v1266
    %v1306 = vunpack.c.l.b16 %v1267
    %v1307 = vunpack.c.l.b16 %v1268
    %v1308 = vunpack.c.l.b16 %v1269
    %v1309 = vpack.c.b16 %v1294, %v1293
    %v1310 = vpack.c.b16 %v1296, %v1295
    %v1311 = vpack.c.b16 %v1298, %v1297
    %v1312 = vpack.c.b16 %v1300, %v1299
    %v1313 = vpack.c.b16 %v1302, %v1301
    %v1314 = vpack.c.b16 %v1304, %v1303
    %v1315 = vpack.c.b16 %v1306, %v1305
    %v1316 = vpack.c.b16 %v1308, %v1307
    %1325 = vmatprep.subr.bf16.mxu0 0
    %1326 = vmatpush1.bf16.msra.mxu0 %v1309
    %1327 = vmatprep.subr.bf16.mxu0 0
    %1328 = vmatpush1.bf16.msra.mxu0 %v1310
    %1329 = vmatprep.subr.bf16.mxu0 0
    %1330 = vmatpush1.bf16.msra.mxu0 %v1311
    %1331 = vmatprep.subr.bf16.mxu0 0
    %1332 = vmatpush1.bf16.msra.mxu0 %v1312
    %1333 = vmatprep.subr.bf16.mxu0 0
    %1334 = vmatpush1.bf16.msra.mxu0 %v1313
    %1335 = vmatprep.subr.bf16.mxu0 0
    %1336 = vmatpush1.bf16.msra.mxu0 %v1314
    %1337 = vmatprep.subr.bf16.mxu0 0
    %1338 = vmatpush1.bf16.msra.mxu0 %v1315
    %1339 = vmatprep.subr.bf16.mxu0 0
    %1340 = vmatpush1.bf16.msra.mxu0 %v1316
    %1341 = vmatprep.subr.bf16.mxu0 0
    %1342 = vmatpush1.bf16.msra.mxu0 0
    %1343 = vmatprep.subr.bf16.mxu0 0
    %1344 = vmatpush1.bf16.msra.mxu0 0
    %1345 = vmatprep.subr.bf16.mxu0 0
    %1346 = vmatpush1.bf16.msra.mxu0 0
    %1347 = vmatprep.subr.bf16.mxu0 0
    %1348 = vmatpush1.bf16.msra.mxu0 0
    %1349 = vmatprep.subr.bf16.mxu0 0
    %1350 = vmatpush1.bf16.msra.mxu0 0
    %1351 = vmatprep.subr.bf16.mxu0 0
    %1352 = vmatpush1.bf16.msra.mxu0 0
    %1353 = vmatprep.subr.bf16.mxu0 0
    %1354 = vmatpush1.bf16.msra.mxu0 0
    %1355 = vmatprep.subr.bf16.mxu0 0
    %1356 = vmatpush1.bf16.msra.mxu0 0
    %1357 = vmatprep.mubr.bf16.mxu0 0
    %1358 = vmatmul.mubr.bf16.gmra.mrb[0].mxu0 %v1253
    %v1359 = vpop.f32.mrb[0].mxu0
    %v1360 = vadd.f32 %v1275, %v1359
    %v1361 = vpop.f32.mrb[0].mxu0
    %v1362 = vpop.f32.mrb[0].mxu0
    %v1363 = vpop.f32.mrb[0].mxu0
    %1364 = vdwg.mxu0
    %v1365 = vmax.f32 %v1360, 0.0
    %v1366 = vpack.c.bf16 %v1365, %v1365
    %v1367 = vld [vmem:[#allocation5] sm:$0xf]
    %v1368 = vld [vmem:[#allocation5 + $0x4] sm:$0xf]
    %v1369 = vld [vmem:[#allocation5 + $0x8] sm:$0xf]
    %v1370 = vld [vmem:[#allocation5 + $0xc] sm:$0xf]
    %v1371 = vld [vmem:[#allocation5 + $0x10] sm:$0xf]
    %v1372 = vld [vmem:[#allocation5 + $0x14] sm:$0xf]
    %v1373 = vld [vmem:[#allocation5 + $0x18] sm:$0xf]
    %v1374 = vld [vmem:[#allocation5 + $0x1c] sm:$0xf]
    %v1375 = vld [vmem:[#allocation5 + $0x20] sm:$0xf]
    %v1376 = vld [vmem:[#allocation5 + $0x24] sm:$0xf]
    %v1377 = vld [vmem:[#allocation5 + $0x28] sm:$0xf]
    %v1378 = vld [vmem:[#allocation5 + $0x2c] sm:$0xf]
    %v1379 = vld [vmem:[#allocation5 + $0x30] sm:$0xf]
    %v1380 = vld [vmem:[#allocation5 + $0x34] sm:$0xf]
    %v1381 = vld [vmem:[#allocation5 + $0x38] sm:$0xf]
    %v1382 = vld [vmem:[#allocation5 + $0x3c] sm:$0xf]
    %v1383 = vld [vmem:[%s6] sm:$0x1]
    %v1385 = vlaneseq
    %v1386 = vshrl.u32 %v1385, 7
    %v1387 = vsub.s32 0, %v1386
    %v1388 = vrot.slane %v1383, %v1387
    %v1406 = vunpack.c.l.b16 %v1367
    %v1407 = vunpack.c.l.b16 %v1368
    %v1408 = vunpack.c.l.b16 %v1369
    %v1409 = vunpack.c.l.b16 %v1370
    %v1410 = vunpack.c.l.b16 %v1371
    %v1411 = vunpack.c.l.b16 %v1372
    %v1412 = vunpack.c.l.b16 %v1373
    %v1413 = vunpack.c.l.b16 %v1374
    %v1414 = vunpack.c.l.b16 %v1375
    %v1415 = vunpack.c.l.b16 %v1376
    %v1416 = vunpack.c.l.b16 %v1377
    %v1417 = vunpack.c.l.b16 %v1378
    %v1418 = vunpack.c.l.b16 %v1379
    %v1419 = vunpack.c.l.b16 %v1380
    %v1420 = vunpack.c.l.b16 %v1381
    %v1421 = vunpack.c.l.b16 %v1382
    %v1422 = vpack.c.b16 %v1407, %v1406
    %v1423 = vpack.c.b16 %v1409, %v1408
    %v1424 = vpack.c.b16 %v1411, %v1410
    %v1425 = vpack.c.b16 %v1413, %v1412
    %v1426 = vpack.c.b16 %v1415, %v1414
    %v1427 = vpack.c.b16 %v1417, %v1416
    %v1428 = vpack.c.b16 %v1419, %v1418
    %v1429 = vpack.c.b16 %v1421, %v1420
    %1438 = vmatprep.subr.bf16.mxu0 0
    %1439 = vmatpush1.bf16.msra.mxu0 %v1422
    %1440 = vmatprep.subr.bf16.mxu0 0
    %1441 = vmatpush1.bf16.msra.mxu0 %v1423
    %1442 = vmatprep.subr.bf16.mxu0 0
    %1443 = vmatpush1.bf16.msra.mxu0 %v1424
    %1444 = vmatprep.subr.bf16.mxu0 0
    %1445 = vmatpush1.bf16.msra.mxu0 %v1425
    %1446 = vmatprep.subr.bf16.mxu0 0
    %1447 = vmatpush1.bf16.msra.mxu0 %v1426
    %1448 = vmatprep.subr.bf16.mxu0 0
    %1449 = vmatpush1.bf16.msra.mxu0 %v1427
    %1450 = vmatprep.subr.bf16.mxu0 0
    %1451 = vmatpush1.bf16.msra.mxu0 %v1428
    %1452 = vmatprep.subr.bf16.mxu0 0
    %1453 = vmatpush1.bf16.msra.mxu0 %v1429
    %1454 = vmatprep.subr.bf16.mxu0 0
    %1455 = vmatpush1.bf16.msra.mxu0 0
    %1456 = vmatprep.subr.bf16.mxu0 0
    %1457 = vmatpush1.bf16.msra.mxu0 0
    %1458 = vmatprep.subr.bf16.mxu0 0
    %1459 = vmatpush1.bf16.msra.mxu0 0
    %1460 = vmatprep.subr.bf16.mxu0 0
    %1461 = vmatpush1.bf16.msra.mxu0 0
    %1462 = vmatprep.subr.bf16.mxu0 0
    %1463 = vmatpush1.bf16.msra.mxu0 0
    %1464 = vmatprep.subr.bf16.mxu0 0
    %1465 = vmatpush1.bf16.msra.mxu0 0
    %1466 = vmatprep.subr.bf16.mxu0 0
    %1467 = vmatpush1.bf16.msra.mxu0 0
    %1468 = vmatprep.subr.bf16.mxu0 0
    %1469 = vmatpush1.bf16.msra.mxu0 0
    %1470 = vmatprep.mubr.bf16.mxu0 0
    %1471 = vmatmul.mubr.bf16.gmra.mrb[0].mxu0 %v1366
    %v1472 = vpop.f32.mrb[0].mxu0
    %v1473 = vadd.f32 %v1388, %v1472
    %v1474 = vpop.f32.mrb[0].mxu0
    %v1475 = vpop.f32.mrb[0].mxu0
    %v1476 = vpop.f32.mrb[0].mxu0
    %1477 = vdwg.mxu0
    %v1478 = vmax.f32 %v1473, 0.0
    %v1479 = vpack.c.bf16 %v1478, %v1478
    %v1480 = vld [vmem:[#allocation7] sm:$0xf]
    %v1481 = vld [vmem:[#allocation7 + $0x4] sm:$0xf]
    %v1482 = vld [vmem:[#allocation7 + $0x8] sm:$0xf]
    %v1483 = vld [vmem:[#allocation7 + $0xc] sm:$0xf]
    %v1484 = vld [vmem:[#allocation7 + $0x10] sm:$0xf]
    %v1485 = vld [vmem:[#allocation7 + $0x14] sm:$0xf]
    %v1486 = vld [vmem:[#allocation7 + $0x18] sm:$0xf]
    %v1487 = vld [vmem:[#allocation7 + $0x1c] sm:$0xf]
    %v1488 = vld [vmem:[#allocation7 + $0x20] sm:$0xf]
    %v1489 = vld [vmem:[#allocation7 + $0x24] sm:$0xf]
    %v1490 = vld [vmem:[#allocation7 + $0x28] sm:$0xf]
    %v1491 = vld [vmem:[#allocation7 + $0x2c] sm:$0xf]
    %v1492 = vld [vmem:[#allocation7 + $0x30] sm:$0xf]
    %v1493 = vld [vmem:[#allocation7 + $0x34] sm:$0xf]
    %v1494 = vld [vmem:[#allocation7 + $0x38] sm:$0xf]
    %v1495 = vld [vmem:[#allocation7 + $0x3c] sm:$0xf]
    %v1496 = vld [vmem:[%s8] sm:$0x1]
    %v1498 = vlaneseq
    %v1499 = vshrl.u32 %v1498, 7
    %v1500 = vsub.s32 0, %v1499
    %v1501 = vrot.slane %v1496, %v1500
    %v1519 = vunpack.c.l.b16 %v1480
    %v1520 = vunpack.c.l.b16 %v1481
    %v1521 = vunpack.c.l.b16 %v1482
    %v1522 = vunpack.c.l.b16 %v1483
    %v1523 = vunpack.c.l.b16 %v1484
    %v1524 = vunpack.c.l.b16 %v1485
    %v1525 = vunpack.c.l.b16 %v1486
    %v1526 = vunpack.c.l.b16 %v1487
    %v1527 = vunpack.c.l.b16 %v1488
    %v1528 = vunpack.c.l.b16 %v1489
    %v1529 = vunpack.c.l.b16 %v1490
    %v1530 = vunpack.c.l.b16 %v1491
    %v1531 = vunpack.c.l.b16 %v1492
    %v1532 = vunpack.c.l.b16 %v1493
    %v1533 = vunpack.c.l.b16 %v1494
    %v1534 = vunpack.c.l.b16 %v1495
    %v1535 = vpack.c.b16 %v1520, %v1519
    %v1536 = vpack.c.b16 %v1522, %v1521
    %v1537 = vpack.c.b16 %v1524, %v1523
    %v1538 = vpack.c.b16 %v1526, %v1525
    %v1539 = vpack.c.b16 %v1528, %v1527
    %v1540 = vpack.c.b16 %v1530, %v1529
    %v1541 = vpack.c.b16 %v1532, %v1531
    %v1542 = vpack.c.b16 %v1534, %v1533
    %1551 = vmatprep.subr.bf16.mxu0 0
    %1552 = vmatpush1.bf16.msra.mxu0 %v1535
    %1553 = vmatprep.subr.bf16.mxu0 0
    %1554 = vmatpush1.bf16.msra.mxu0 %v1536
    %1555 = vmatprep.subr.bf16.mxu0 0
    %1556 = vmatpush1.bf16.msra.mxu0 %v1537
    %1557 = vmatprep.subr.bf16.mxu0 0
    %1558 = vmatpush1.bf16.msra.mxu0 %v1538
    %1559 = vmatprep.subr.bf16.mxu0 0
    %1560 = vmatpush1.bf16.msra.mxu0 %v1539
    %1561 = vmatprep.subr.bf16.mxu0 0
    %1562 = vmatpush1.bf16.msra.mxu0 %v1540
    %1563 = vmatprep.subr.bf16.mxu0 0
    %1564 = vmatpush1.bf16.msra.mxu0 %v1541
    %1565 = vmatprep.subr.bf16.mxu0 0
    %1566 = vmatpush1.bf16.msra.mxu0 %v1542
    %1567 = vmatprep.subr.bf16.mxu0 0
    %1568 = vmatpush1.bf16.msra.mxu0 0
    %1569 = vmatprep.subr.bf16.mxu0 0
    %1570 = vmatpush1.bf16.msra.mxu0 0
    %1571 = vmatprep.subr.bf16.mxu0 0
    %1572 = vmatpush1.bf16.msra.mxu0 0
    %1573 = vmatprep.subr.bf16.mxu0 0
    %1574 = vmatpush1.bf16.msra.mxu0 0
    %1575 = vmatprep.subr.bf16.mxu0 0
    %1576 = vmatpush1.bf16.msra.mxu0 0
    %1577 = vmatprep.subr.bf16.mxu0 0
    %1578 = vmatpush1.bf16.msra.mxu0 0
    %1579 = vmatprep.subr.bf16.mxu0 0
    %1580 = vmatpush1.bf16.msra.mxu0 0
    %1581 = vmatprep.subr.bf16.mxu0 0
    %1582 = vmatpush1.bf16.msra.mxu0 0
    %1583 = vmatprep.mubr.bf16.mxu0 0
    %1584 = vmatmul.mubr.bf16.gmra.mrb[0].mxu0 %v1479
    %v1585 = vpop.f32.mrb[0].mxu0
    %v1586 = vadd.f32 %v1501, %v1585
    %v1587 = vpop.f32.mrb[0].mxu0
    %v1588 = vpop.f32.mrb[0].mxu0
    %v1589 = vpop.f32.mrb[0].mxu0
    %1590 = vdwg.mxu0
    %v1591 = vmax.f32 %v1586, 0.0
    %v1592 = vpack.c.bf16 %v1591, %v1591
    %v1593 = vld [vmem:[%s9] sm:$0xff]
    %v1594 = vld [vmem:[%s9 + $0x8] sm:$0xff]
    %v1595 = vld [vmem:[%s9 + $0x10] sm:$0xff]
    %v1596 = vld [vmem:[%s9 + $0x18] sm:$0xf]
    %v1597 = vld [vmem:[%s9 + $0x1c] sm:$0xff]
    %v1598 = vld [vmem:[%s9 + $0x24] sm:$0xff]
    %v1599 = vld [vmem:[%s9 + $0x2c] sm:$0xff]
    %v1600 = vld [vmem:[%s9 + $0x34] sm:$0xf]
    %v1601 = vld [vmem:[%s9 + $0x38] sm:$0xff]
    %v1602 = vld [vmem:[%s9 + $0x40] sm:$0xff]
    %v1603 = vld [vmem:[%s9 + $0x48] sm:$0xff]
    %v1604 = vld [vmem:[%s9 + $0x50] sm:$0xf]
    %v1605 = vld [vmem:[%s9 + $0x54] sm:$0xff]
    %v1606 = vld [vmem:[%s9 + $0x5c] sm:$0xff]
    %v1607 = vld [vmem:[%s9 + $0x64] sm:$0xff]
    %v1608 = vld [vmem:[%s9 + $0x6c] sm:$0xf]
    %v1609 = vld [vmem:[%s9 + $0x70] sm:$0xff]
    %v1610 = vld [vmem:[%s9 + $0x78] sm:$0xff]
    %v1611 = vld [vmem:[%s9 + $0x80] sm:$0xff]
    %v1612 = vld [vmem:[%s9 + $0x88] sm:$0xf]
    %v1613 = vld [vmem:[%s9 + $0x8c] sm:$0xff]
    %v1614 = vld [vmem:[%s9 + $0x94] sm:$0xff]
    %v1615 = vld [vmem:[%s9 + $0x9c] sm:$0xff]
    %v1616 = vld [vmem:[%s9 + $0xa4] sm:$0xf]
    %v1617 = vld [vmem:[%s9 + $0xa8] sm:$0xff]
    %v1618 = vld [vmem:[%s9 + $0xb0] sm:$0xff]
    %v1619 = vld [vmem:[%s9 + $0xb8] sm:$0xff]
    %v1620 = vld [vmem:[%s9 + $0xc0] sm:$0xf]
    %v1621 = vld [vmem:[%s9 + $0xc4] sm:$0xff]
    %v1622 = vld [vmem:[%s9 + $0xcc] sm:$0xff]
    %v1623 = vld [vmem:[%s9 + $0xd4] sm:$0xff]
    %v1624 = vld [vmem:[%s9 + $0xdc] sm:$0xf]
    %v1625 = vld [vmem:[%s9 + $0xe0] sm:$0xff]
    %v1626 = vld [vmem:[%s9 + $0xe8] sm:$0xff]
    %v1627 = vld [vmem:[%s9 + $0xf0] sm:$0xff]
    %v1628 = vld [vmem:[%s9 + $0xf8] sm:$0xf]
    %v1629 = vld [vmem:[%s9 + $0xfc] sm:$0xff]
    %v1630 = vld [vmem:[%s9 + $0x104] sm:$0xff]
    %v1631 = vld [vmem:[%s9 + $0x10c] sm:$0xff]
    %v1632 = vld [vmem:[%s9 + $0x114] sm:$0xf]
    %v1633 = vld [vmem:[%s9 + $0x118] sm:$0xff]
    %v1634 = vld [vmem:[%s9 + $0x120] sm:$0xff]
    %v1635 = vld [vmem:[%s9 + $0x128] sm:$0xff]
    %v1636 = vld [vmem:[%s9 + $0x130] sm:$0xf]
    %v1637 = vld [vmem:[%s9 + $0x134] sm:$0xff]
    %v1638 = vld [vmem:[%s9 + $0x13c] sm:$0xff]
    %v1639 = vld [vmem:[%s9 + $0x144] sm:$0xff]
    %v1640 = vld [vmem:[%s9 + $0x14c] sm:$0xf]
    %v1641 = vld [vmem:[%s9 + $0x150] sm:$0xff]
    %v1642 = vld [vmem:[%s9 + $0x158] sm:$0xff]
    %v1643 = vld [vmem:[%s9 + $0x160] sm:$0xff]
    %v1644 = vld [vmem:[%s9 + $0x168] sm:$0xf]
    %v1645 = vld [vmem:[%s9 + $0x16c] sm:$0xff]
    %v1646 = vld [vmem:[%s9 + $0x174] sm:$0xff]
    %v1647 = vld [vmem:[%s9 + $0x17c] sm:$0xff]
    %v1648 = vld [vmem:[%s9 + $0x184] sm:$0xf]
    %v1649 = vld [vmem:[%s9 + $0x188] sm:$0xff]
    %v1650 = vld [vmem:[%s9 + $0x190] sm:$0xff]
    %v1651 = vld [vmem:[%s9 + $0x198] sm:$0xff]
    %v1652 = vld [vmem:[%s9 + $0x1a0] sm:$0xf]
    %v1653 = vld [vmem:[%s9 + $0x1a4] sm:$0xff]
    %v1654 = vld [vmem:[%s9 + $0x1ac] sm:$0xff]
    %v1655 = vld [vmem:[%s9 + $0x1b4] sm:$0xff]
    %v1656 = vld [vmem:[%s9 + $0x1bc] sm:$0xf]
    %v1657 = vld [vmem:[%s10] sm:$0x7f]
    %v1659 = vlaneseq
    %v1660 = vshrl.u32 %v1659, 7
    %v1661 = vsub.s32 0, %v1660
    %v1662 = vrot.slane %v1657, %v1661
    %v1663 = vlaneseq
    %v1664 = vshrl.u32 %v1663, 7
    %v1665 = vsub.s32 1, %v1664
    %v1666 = vrot.slane %v1657, %v1665
    %v1667 = vlaneseq
    %v1668 = vshrl.u32 %v1667, 7
    %v1669 = vsub.s32 2, %v1668
    %v1670 = vrot.slane %v1657, %v1669
    %v1671 = vlaneseq
    %v1672 = vshrl.u32 %v1671, 7
    %v1673 = vsub.s32 3, %v1672
    %v1674 = vrot.slane %v1657, %v1673
    %v1675 = vlaneseq
    %v1676 = vshrl.u32 %v1675, 7
    %v1677 = vsub.s32 4, %v1676
    %v1678 = vrot.slane %v1657, %v1677
    %v1679 = vlaneseq
    %v1680 = vshrl.u32 %v1679, 7
    %v1681 = vsub.s32 5, %v1680
    %v1682 = vrot.slane %v1657, %v1681
    %v1683 = vlaneseq
    %v1684 = vshrl.u32 %v1683, 7
    %v1685 = vsub.s32 6, %v1684
    %v1686 = vrot.slane %v1657, %v1685
    %v1758 = vunpack.c.l.b16 %v1593
    %v1759 = vunpack.c.h.b16 %v1593
    %v1760 = vunpack.c.l.b16 %v1594
    %v1761 = vunpack.c.h.b16 %v1594
    %v1762 = vunpack.c.l.b16 %v1595
    %v1763 = vunpack.c.h.b16 %v1595
    %v1764 = vunpack.c.l.b16 %v1596
    %v1765 = vunpack.c.l.b16 %v1597
    %v1766 = vunpack.c.h.b16 %v1597
    %v1767 = vunpack.c.l.b16 %v1598
    %v1768 = vunpack.c.h.b16 %v1598
    %v1769 = vunpack.c.l.b16 %v1599
    %v1770 = vunpack.c.h.b16 %v1599
    %v1771 = vunpack.c.l.b16 %v1600
    %v1772 = vunpack.c.l.b16 %v1601
    %v1773 = vunpack.c.h.b16 %v1601
    %v1774 = vunpack.c.l.b16 %v1602
    %v1775 = vunpack.c.h.b16 %v1602
    %v1776 = vunpack.c.l.b16 %v1603
    %v1777 = vunpack.c.h.b16 %v1603
    %v1778 = vunpack.c.l.b16 %v1604
    %v1779 = vunpack.c.l.b16 %v1605
    %v1780 = vunpack.c.h.b16 %v1605
    %v1781 = vunpack.c.l.b16 %v1606
    %v1782 = vunpack.c.h.b16 %v1606
    %v1783 = vunpack.c.l.b16 %v1607
    %v1784 = vunpack.c.h.b16 %v1607
    %v1785 = vunpack.c.l.b16 %v1608
    %v1786 = vunpack.c.l.b16 %v1609
    %v1787 = vunpack.c.h.b16 %v1609
    %v1788 = vunpack.c.l.b16 %v1610
    %v1789 = vunpack.c.h.b16 %v1610
    %v1790 = vunpack.c.l.b16 %v1611
    %v1791 = vunpack.c.h.b16 %v1611
    %v1792 = vunpack.c.l.b16 %v1612
    %v1793 = vunpack.c.l.b16 %v1613
    %v1794 = vunpack.c.h.b16 %v1613
    %v1795 = vunpack.c.l.b16 %v1614
    %v1796 = vunpack.c.h.b16 %v1614
    %v1797 = vunpack.c.l.b16 %v1615
    %v1798 = vunpack.c.h.b16 %v1615
    %v1799 = vunpack.c.l.b16 %v1616
    %v1800 = vunpack.c.l.b16 %v1617
    %v1801 = vunpack.c.h.b16 %v1617
    %v1802 = vunpack.c.l.b16 %v1618
    %v1803 = vunpack.c.h.b16 %v1618
    %v1804 = vunpack.c.l.b16 %v1619
    %v1805 = vunpack.c.h.b16 %v1619
    %v1806 = vunpack.c.l.b16 %v1620
    %v1807 = vunpack.c.l.b16 %v1621
    %v1808 = vunpack.c.h.b16 %v1621
    %v1809 = vunpack.c.l.b16 %v1622
    %v1810 = vunpack.c.h.b16 %v1622
    %v1811 = vunpack.c.l.b16 %v1623
    %v1812 = vunpack.c.h.b16 %v1623
    %v1813 = vunpack.c.l.b16 %v1624
    %v1814 = vunpack.c.l.b16 %v1625
    %v1815 = vunpack.c.h.b16 %v1625
    %v1816 = vunpack.c.l.b16 %v1626
    %v1817 = vunpack.c.h.b16 %v1626
    %v1818 = vunpack.c.l.b16 %v1627
    %v1819 = vunpack.c.h.b16 %v1627
    %v1820 = vunpack.c.l.b16 %v1628
    %v1821 = vunpack.c.l.b16 %v1629
    %v1822 = vunpack.c.h.b16 %v1629
    %v1823 = vunpack.c.l.b16 %v1630
    %v1824 = vunpack.c.h.b16 %v1630
    %v1825 = vunpack.c.l.b16 %v1631
    %v1826 = vunpack.c.h.b16 %v1631
    %v1827 = vunpack.c.l.b16 %v1632
    %v1828 = vunpack.c.l.b16 %v1633
    %v1829 = vunpack.c.h.b16 %v1633
    %v1830 = vunpack.c.l.b16 %v1634
    %v1831 = vunpack.c.h.b16 %v1634
    %v1832 = vunpack.c.l.b16 %v1635
    %v1833 = vunpack.c.h.b16 %v1635
    %v1834 = vunpack.c.l.b16 %v1636
    %v1835 = vunpack.c.l.b16 %v1637
    %v1836 = vunpack.c.h.b16 %v1637
    %v1837 = vunpack.c.l.b16 %v1638
    %v1838 = vunpack.c.h.b16 %v1638
    %v1839 = vunpack.c.l.b16 %v1639
    %v1840 = vunpack.c.h.b16 %v1639
    %v1841 = vunpack.c.l.b16 %v1640
    %v1842 = vunpack.c.l.b16 %v1641
    %v1843 = vunpack.c.h.b16 %v1641
    %v1844 = vunpack.c.l.b16 %v1642
    %v1845 = vunpack.c.h.b16 %v1642
    %v1846 = vunpack.c.l.b16 %v1643
    %v1847 = vunpack.c.h.b16 %v1643
    %v1848 = vunpack.c.l.b16 %v1644
    %v1849 = vunpack.c.l.b16 %v1645
    %v1850 = vunpack.c.h.b16 %v1645
    %v1851 = vunpack.c.l.b16 %v1646
    %v1852 = vunpack.c.h.b16 %v1646
    %v1853 = vunpack.c.l.b16 %v1647
    %v1854 = vunpack.c.h.b16 %v1647
    %v1855 = vunpack.c.l.b16 %v1648
    %v1856 = vunpack.c.l.b16 %v1649
    %v1857 = vunpack.c.h.b16 %v1649
    %v1858 = vunpack.c.l.b16 %v1650
    %v1859 = vunpack.c.h.b16 %v1650
    %v1860 = vunpack.c.l.b16 %v1651
    %v1861 = vunpack.c.h.b16 %v1651
    %v1862 = vunpack.c.l.b16 %v1652
    %v1863 = vunpack.c.l.b16 %v1653
    %v1864 = vunpack.c.h.b16 %v1653
    %v1865 = vunpack.c.l.b16 %v1654
    %v1866 = vunpack.c.h.b16 %v1654
    %v1867 = vunpack.c.l.b16 %v1655
    %v1868 = vunpack.c.h.b16 %v1655
    %v1869 = vunpack.c.l.b16 %v1656
    %v1870 = vpack.c.b16 %v1765, %v1758
    %v1871 = vpack.c.b16 %v1766, %v1759
    %v1872 = vpack.c.b16 %v1767, %v1760
    %v1873 = vpack.c.b16 %v1768, %v1761
    %v1874 = vpack.c.b16 %v1769, %v1762
    %v1875 = vpack.c.b16 %v1770, %v1763
    %v1876 = vpack.c.b16 %v1771, %v1764
    %v1877 = vpack.c.b16 %v1779, %v1772
    %v1878 = vpack.c.b16 %v1780, %v1773
    %v1879 = vpack.c.b16 %v1781, %v1774
    %v1880 = vpack.c.b16 %v1782, %v1775
    %v1881 = vpack.c.b16 %v1783, %v1776
    %v1882 = vpack.c.b16 %v1784, %v1777
    %v1883 = vpack.c.b16 %v1785, %v1778
    %v1884 = vpack.c.b16 %v1793, %v1786
    %v1885 = vpack.c.b16 %v1794, %v1787
    %v1886 = vpack.c.b16 %v1795, %v1788
    %v1887 = vpack.c.b16 %v1796, %v1789
    %v1888 = vpack.c.b16 %v1797, %v1790
    %v1889 = vpack.c.b16 %v1798, %v1791
    %v1890 = vpack.c.b16 %v1799, %v1792
    %v1891 = vpack.c.b16 %v1807, %v1800
    %v1892 = vpack.c.b16 %v1808, %v1801
    %v1893 = vpack.c.b16 %v1809, %v1802
    %v1894 = vpack.c.b16 %v1810, %v1803
    %v1895 = vpack.c.b16 %v1811, %v1804
    %v1896 = vpack.c.b16 %v1812, %v1805
    %v1897 = vpack.c.b16 %v1813, %v1806
    %v1898 = vpack.c.b16 %v1821, %v1814
    %v1899 = vpack.c.b16 %v1822, %v1815
    %v1900 = vpack.c.b16 %v1823, %v1816
    %v1901 = vpack.c.b16 %v1824, %v1817
    %v1902 = vpack.c.b16 %v1825, %v1818
    %v1903 = vpack.c.b16 %v1826, %v1819
    %v1904 = vpack.c.b16 %v1827, %v1820
    %v1905 = vpack.c.b16 %v1835, %v1828
    %v1906 = vpack.c.b16 %v1836, %v1829
    %v1907 = vpack.c.b16 %v1837, %v1830
    %v1908 = vpack.c.b16 %v1838, %v1831
    %v1909 = vpack.c.b16 %v1839, %v1832
    %v1910 = vpack.c.b16 %v1840, %v1833
    %v1911 = vpack.c.b16 %v1841, %v1834
    %v1912 = vpack.c.b16 %v1849, %v1842
    %v1913 = vpack.c.b16 %v1850, %v1843
    %v1914 = vpack.c.b16 %v1851, %v1844
    %v1915 = vpack.c.b16 %v1852, %v1845
    %v1916 = vpack.c.b16 %v1853, %v1846
    %v1917 = vpack.c.b16 %v1854, %v1847
    %v1918 = vpack.c.b16 %v1855, %v1848
    %v1919 = vpack.c.b16 %v1863, %v1856
    %v1920 = vpack.c.b16 %v1864, %v1857
    %v1921 = vpack.c.b16 %v1865, %v1858
    %v1922 = vpack.c.b16 %v1866, %v1859
    %v1923 = vpack.c.b16 %v1867, %v1860
    %v1924 = vpack.c.b16 %v1868, %v1861
    %v1925 = vpack.c.b16 %v1869, %v1862
    %1982 = vmatprep.subr.bf16.mxu0 %v1871
    %1983 = vmatpush1.bf16.msra.mxu0 %v1870
    %1984 = vmatprep.subr.bf16.mxu0 %v1878
    %1985 = vmatpush1.bf16.msra.mxu0 %v1877
    %1986 = vmatprep.subr.bf16.mxu0 %v1885
    %1987 = vmatpush1.bf16.msra.mxu0 %v1884
    %1988 = vmatprep.subr.bf16.mxu0 %v1892
    %1989 = vmatpush1.bf16.msra.mxu0 %v1891
    %1990 = vmatprep.subr.bf16.mxu0 %v1899
    %1991 = vmatpush1.bf16.msra.mxu0 %v1898
    %1992 = vmatprep.subr.bf16.mxu0 %v1906
    %1993 = vmatpush1.bf16.msra.mxu0 %v1905
    %1994 = vmatprep.subr.bf16.mxu0 %v1913
    %1995 = vmatpush1.bf16.msra.mxu0 %v1912
    %1996 = vmatprep.subr.bf16.mxu0 %v1920
    %1997 = vmatpush1.bf16.msra.mxu0 %v1919
    %1998 = vmatprep.subr.bf16.mxu0 0
    %1999 = vmatpush1.bf16.msra.mxu0 0
    %2000 = vmatprep.subr.bf16.mxu0 0
    %2001 = vmatpush1.bf16.msra.mxu0 0
    %2002 = vmatprep.subr.bf16.mxu0 0
    %2003 = vmatpush1.bf16.msra.mxu0 0
    %2004 = vmatprep.subr.bf16.mxu0 0
    %2005 = vmatpush1.bf16.msra.mxu0 0
    %2006 = vmatprep.subr.bf16.mxu0 0
    %2007 = vmatpush1.bf16.msra.mxu0 0
    %2008 = vmatprep.subr.bf16.mxu0 0
    %2009 = vmatpush1.bf16.msra.mxu0 0
    %2010 = vmatprep.subr.bf16.mxu0 0
    %2011 = vmatpush1.bf16.msra.mxu0 0
    %2012 = vmatprep.subr.bf16.mxu0 0
    %2013 = vmatpush1.bf16.msra.mxu0 0
    %2014 = vmatprep.mubr.bf16.mxu0 0
    %2015 = vmatmul.mubr.bf16.gmra.mrb[0].mxu0 %v1592
    %v2016 = vpop.f32.mrb[0].mxu0
    %v2017 = vadd.f32 %v1662, %v2016
    %v2018 = vpop.f32.mrb[0].mxu0
    %v2019 = vadd.f32 %v1666, %v2018
    %v2020 = vpop.f32.mrb[0].mxu0
    %v2021 = vpop.f32.mrb[0].mxu0
    %2022 = vdwg.mxu0
    %2023 = vmatprep.subr.bf16.mxu0 %v1873
    %2024 = vmatpush1.bf16.msra.mxu0 %v1872
    %2025 = vmatprep.subr.bf16.mxu0 %v1880
    %2026 = vmatpush1.bf16.msra.mxu0 %v1879
    %2027 = vmatprep.subr.bf16.mxu0 %v1887
    %2028 = vmatpush1.bf16.msra.mxu0 %v1886
    %2029 = vmatprep.subr.bf16.mxu0 %v1894
    %2030 = vmatpush1.bf16.msra.mxu0 %v1893
    %2031 = vmatprep.subr.bf16.mxu0 %v1901
    %2032 = vmatpush1.bf16.msra.mxu0 %v1900
    %2033 = vmatprep.subr.bf16.mxu0 %v1908
    %2034 = vmatpush1.bf16.msra.mxu0 %v1907
    %2035 = vmatprep.subr.bf16.mxu0 %v1915
    %2036 = vmatpush1.bf16.msra.mxu0 %v1914
    %2037 = vmatprep.subr.bf16.mxu0 %v1922
    %2038 = vmatpush1.bf16.msra.mxu0 %v1921
    %2039 = vmatprep.subr.bf16.mxu0 0
    %2040 = vmatpush1.bf16.msra.mxu0 0
    %2041 = vmatprep.subr.bf16.mxu0 0
    %2042 = vmatpush1.bf16.msra.mxu0 0
    %2043 = vmatprep.subr.bf16.mxu0 0
    %2044 = vmatpush1.bf16.msra.mxu0 0
    %2045 = vmatprep.subr.bf16.mxu0 0
    %2046 = vmatpush1.bf16.msra.mxu0 0
    %2047 = vmatprep.subr.bf16.mxu0 0
    %2048 = vmatpush1.bf16.msra.mxu0 0
    %2049 = vmatprep.subr.bf16.mxu0 0
    %2050 = vmatpush1.bf16.msra.mxu0 0
    %2051 = vmatprep.subr.bf16.mxu0 0
    %2052 = vmatpush1.bf16.msra.mxu0 0
    %2053 = vmatprep.subr.bf16.mxu0 0
    %2054 = vmatpush1.bf16.msra.mxu0 0
    %2055 = vmatprep.mubr.bf16.mxu0 0
    %2056 = vmatmul.mubr.bf16.gmra.mrb[0].mxu0 %v1592
    %v2057 = vpop.f32.mrb[0].mxu0
    %v2058 = vadd.f32 %v1670, %v2057
    %v2059 = vpop.f32.mrb[0].mxu0
    %v2060 = vadd.f32 %v1674, %v2059
    %v2061 = vpop.f32.mrb[0].mxu0
    %v2062 = vpop.f32.mrb[0].mxu0
    %2063 = vdwg.mxu0
    %2064 = vmatprep.subr.bf16.mxu0 %v1875
    %2065 = vmatpush1.bf16.msra.mxu0 %v1874
    %2066 = vmatprep.subr.bf16.mxu0 %v1882
    %2067 = vmatpush1.bf16.msra.mxu0 %v1881
    %2068 = vmatprep.subr.bf16.mxu0 %v1889
    %2069 = vmatpush1.bf16.msra.mxu0 %v1888
    %2070 = vmatprep.subr.bf16.mxu0 %v1896
    %2071 = vmatpush1.bf16.msra.mxu0 %v1895
    %2072 = vmatprep.subr.bf16.mxu0 %v1903
    %2073 = vmatpush1.bf16.msra.mxu0 %v1902
    %2074 = vmatprep.subr.bf16.mxu0 %v1910
    %2075 = vmatpush1.bf16.msra.mxu0 %v1909
    %2076 = vmatprep.subr.bf16.mxu0 %v1917
    %2077 = vmatpush1.bf16.msra.mxu0 %v1916
    %2078 = vmatprep.subr.bf16.mxu0 %v1924
    %2079 = vmatpush1.bf16.msra.mxu0 %v1923
    %2080 = vmatprep.subr.bf16.mxu0 0
    %2081 = vmatpush1.bf16.msra.mxu0 0
    %2082 = vmatprep.subr.bf16.mxu0 0
    %2083 = vmatpush1.bf16.msra.mxu0 0
    %2084 = vmatprep.subr.bf16.mxu0 0
    %2085 = vmatpush1.bf16.msra.mxu0 0
    %2086 = vmatprep.subr.bf16.mxu0 0
    %2087 = vmatpush1.bf16.msra.mxu0 0
    %2088 = vmatprep.subr.bf16.mxu0 0
    %2089 = vmatpush1.bf16.msra.mxu0 0
    %2090 = vmatprep.subr.bf16.mxu0 0
    %2091 = vmatpush1.bf16.msra.mxu0 0
    %2092 = vmatprep.subr.bf16.mxu0 0
    %2093 = vmatpush1.bf16.msra.mxu0 0
    %2094 = vmatprep.subr.bf16.mxu0 0
    %2095 = vmatpush1.bf16.msra.mxu0 0
    %2096 = vmatprep.mubr.bf16.mxu0 0
    %2097 = vmatmul.mubr.bf16.gmra.mrb[0].mxu0 %v1592
    %v2098 = vpop.f32.mrb[0].mxu0
    %v2099 = vadd.f32 %v1678, %v2098
    %v2100 = vpop.f32.mrb[0].mxu0
    %v2101 = vadd.f32 %v1682, %v2100
    %v2102 = vpop.f32.mrb[0].mxu0
    %v2103 = vpop.f32.mrb[0].mxu0
    %2104 = vdwg.mxu0
    %2105 = vmatprep.subr.bf16.mxu0 0
    %2106 = vmatpush1.bf16.msra.mxu0 %v1876
    %2107 = vmatprep.subr.bf16.mxu0 0
    %2108 = vmatpush1.bf16.msra.mxu0 %v1883
    %2109 = vmatprep.subr.bf16.mxu0 0
    %2110 = vmatpush1.bf16.msra.mxu0 %v1890
    %2111 = vmatprep.subr.bf16.mxu0 0
    %2112 = vmatpush1.bf16.msra.mxu0 %v1897
    %2113 = vmatprep.subr.bf16.mxu0 0
    %2114 = vmatpush1.bf16.msra.mxu0 %v1904
    %2115 = vmatprep.subr.bf16.mxu0 0
    %2116 = vmatpush1.bf16.msra.mxu0 %v1911
    %2117 = vmatprep.subr.bf16.mxu0 0
    %2118 = vmatpush1.bf16.msra.mxu0 %v1918
    %2119 = vmatprep.subr.bf16.mxu0 0
    %2120 = vmatpush1.bf16.msra.mxu0 %v1925
    %2121 = vmatprep.subr.bf16.mxu0 0
    %2122 = vmatpush1.bf16.msra.mxu0 0
    %2123 = vmatprep.subr.bf16.mxu0 0
    %2124 = vmatpush1.bf16.msra.mxu0 0
    %2125 = vmatprep.subr.bf16.mxu0 0
    %2126 = vmatpush1.bf16.msra.mxu0 0
    %2127 = vmatprep.subr.bf16.mxu0 0
    %2128 = vmatpush1.bf16.msra.mxu0 0
    %2129 = vmatprep.subr.bf16.mxu0 0
    %2130 = vmatpush1.bf16.msra.mxu0 0
    %2131 = vmatprep.subr.bf16.mxu0 0
    %2132 = vmatpush1.bf16.msra.mxu0 0
    %2133 = vmatprep.subr.bf16.mxu0 0
    %2134 = vmatpush1.bf16.msra.mxu0 0
    %2135 = vmatprep.subr.bf16.mxu0 0
    %2136 = vmatpush1.bf16.msra.mxu0 0
    %2137 = vmatprep.mubr.bf16.mxu0 0
    %2138 = vmatmul.mubr.bf16.gmra.mrb[0].mxu0 %v1592
    %v2139 = vpop.f32.mrb[0].mxu0
    %v2140 = vadd.f32 %v1686, %v2139
    %v2141 = vpop.f32.mrb[0].mxu0
    %v2142 = vpop.f32.mrb[0].mxu0
    %v2143 = vpop.f32.mrb[0].mxu0
    %2144 = vdwg.mxu0
    %v2152 = vcombine.low %v2017, %v2019
    %v2153 = vcombine.high %v2017, %v2019
    %v2154 = vcombine.low %v2058, %v2060
    %v2155 = vcombine.high %v2058, %v2060
    %v2157 = vunpack.c.l.s4 1983009808
    %v2158 = vunpack.c.0.s8 %v2157
    %v2159 = vlaneseq
    %v2160 = vshrl.u32 %v2159, 7
    %v2161 = vsub.s32 %v2158, %v2160
    %v2162 = vrot.slane %v2152, %v2161
    %v2164 = vunpack.c.l.s4 1983009808
    %v2165 = vunpack.c.0.s8 %v2164
    %v2166 = vlaneseq
    %v2167 = vshrl.u32 %v2166, 7
    %v2168 = vsub.s32 %v2165, %v2167
    %v2169 = vrot.slane %v2153, %v2168
    %v2171 = vunpack.c.l.s4 1983009808
    %v2172 = vunpack.c.0.s8 %v2171
    %v2173 = vlaneseq
    %v2174 = vshrl.u32 %v2173, 7
    %v2175 = vsub.s32 %v2172, %v2174
    %v2176 = vrot.slane %v2154, %v2175
    %v2178 = vunpack.c.l.s4 1983009808
    %v2179 = vunpack.c.0.s8 %v2178
    %v2180 = vlaneseq
    %v2181 = vshrl.u32 %v2180, 7
    %v2182 = vsub.s32 %v2179, %v2181
    %v2183 = vrot.slane %v2155, %v2182
    %v2184 = vcombine.low %v2162, %v2176
    %v2185 = vcombine.high %v2162, %v2176
    %v2186 = vcombine.low %v2169, %v2183
    %v2187 = vcombine.high %v2169, %v2183
    %v2188 = vcombine.low %v2099, %v2101
    %v2189 = vcombine.high %v2099, %v2101
    %v2190 = vcombine.high %v2140, %v2140
    %v2192 = vunpack.c.l.s4 1983009808
    %v2193 = vunpack.c.0.s8 %v2192
    %v2194 = vlaneseq
    %v2195 = vshrl.u32 %v2194, 7
    %v2196 = vsub.s32 %v2193, %v2195
    %v2197 = vrot.slane %v2188, %v2196
    %v2199 = vunpack.c.l.s4 1983009808
    %v2200 = vunpack.c.0.s8 %v2199
    %v2201 = vlaneseq
    %v2202 = vshrl.u32 %v2201, 7
    %v2203 = vsub.s32 %v2200, %v2202
    %v2204 = vrot.slane %v2189, %v2203
    %v2206 = vunpack.c.l.s4 1983009808
    %v2207 = vunpack.c.0.s8 %v2206
    %v2208 = vlaneseq
    %v2209 = vshrl.u32 %v2208, 7
    %v2210 = vsub.s32 %v2207, %v2209
    %v2211 = vrot.slane %v2140, %v2210
    %v2213 = vunpack.c.l.s4 1983009808
    %v2214 = vunpack.c.0.s8 %v2213
    %v2215 = vlaneseq
    %v2216 = vshrl.u32 %v2215, 7
    %v2217 = vsub.s32 %v2214, %v2216
    %v2218 = vrot.slane %v2190, %v2217
    %v2219 = vcombine.low %v2197, %v2211
    %v2220 = vcombine.high %v2197, %v2211
    %v2221 = vcombine.low %v2204, %v2218
    %v2222 = vcombine.high %v2204, %v2218
    %2231 = vst [vmem:[#allocation8] sm:$0xff] %v2184
    %vm2232 = vcmask 1041408
    %vm2233 = vcmask 1043458
    %vm2234 = vmor %vm2233, %vm2232
    %vm2235 = vcmask 259076
    %vm2236 = vmor %vm2235, %vm2234
    %2237 = vst.msk [vmem:[#allocation8 + $0x8] sm:$0x3f] %vm2236, %v2219
    %2238 = vst [vmem:[#allocation8 + $0xe] sm:$0xff] %v2185
    %2239 = vst.msk [vmem:[#allocation8 + $0x16] sm:$0x3f] %vm2236, %v2220
    %2240 = vst [vmem:[#allocation8 + $0x1c] sm:$0xff] %v2186
    %2241 = vst.msk [vmem:[#allocation8 + $0x24] sm:$0x3f] %vm2236, %v2221
    %2242 = vst [vmem:[#allocation8 + $0x2a] sm:$0xff] %v2187
    %2243 = vst.msk [vmem:[#allocation8 + $0x32] sm:$0x3f] %vm2236, %v2222
    // Predicated region
    $region58: #{tpu_custom_call.1} parent=1 // pred_check
      _
    $region59: #{tpu_custom_call.1} parent=1 // pred_check_branch
      %2245 = sbr.rel (0) target = $region61
    $region60: #{tpu_custom_call.1} parent=1 // pred_region
      %s2247 = ssub.s32 896, 224
      %2248 = vsyncadd [#allocation4], %s2247
      %s2249 = sshll.u32 [#allocation8], 4
      %s2250 = int_to_ptr.vmem [resolvable:$true] %s2249
      %2255 = dma.vmem_to_hbm [thread:$0]  %s2250, 224, %s11, [#allocation4], 224, 224, 14
    $region61: #{tpu_custom_call.1} parent=1 // pred_fallthru
      _
    // Predicated region
    $region62: #{tpu_custom_call.1} parent=1 // pred_check
      _
    $region63: #{tpu_custom_call.1} parent=1 // pred_check_branch
      %2257 = sbr.rel (0) target = $region65
    $region64: #{tpu_custom_call.1} parent=1 // pred_region
      %2258 = dma.done [#allocation4], 896
    $region65: #{tpu_custom_call.1} parent=1 // pred_fallthru
      _
    %2259 = vsyncpa [#allocation3], 1
    %2260 = vsyncpa [#allocation6], 1
    %2261 = vsyncpa [#allocation4], 1

</llo_original>
